<compile_context>
chip_gen: v7x
topology: tpu7x:2x2x1
jax: 0.10.0
libtpu: 0.0.40
codegen_flags: <defaults>
</compile_context>

<pallas_src>
import functools

import jax
import jax.numpy as jnp
import numpy as np
from jax.experimental import pallas as pl
from jax.experimental.pallas import tpu as pltpu


# ---------------------------------------------------------------------------
# Pallas kernel: the full encoder stack. Grid = (batch_chunk, layer); the layer
# axis is the innermost "arbitrary" axis and the activation is carried between
# layers in a resident VMEM scratch.
# ---------------------------------------------------------------------------
def encoder_stack_kernel(x_ref, mask_ref,
                         wqkv_ref, wo_ref,
                         ln1g_ref, ln1b_ref,
                         w1_ref, w2_ref,
                         ln2g_ref, ln2b_ref,
                         out_ref, attn_ref,
                         carry_ref, head_sc, ctx_sc,
                         *, heads, d_k, seq_len, bt, eps=1e-5):
    l = pl.program_id(1)
    n_layers = pl.num_programs(1)
    d_model = heads * d_k
    rows = bt * seq_len
    hb = heads * bt

    # Layer 0 consumes the embedded tokens; later layers consume the activation that
    # stayed resident in VMEM (no HBM round trip between layers).
    @pl.when(l == 0)
    def _():
        carry_ref[...] = x_ref[...]

    x2 = carry_ref[...].reshape(rows, d_model)                    # [rows, D] f32
    x2_bf = x2.astype(jnp.bfloat16)

    # ---- fused QKV projection: one MXU stream with N = 3*D ------------------------
    # (1/sqrt(d_k) is already folded into the Wq columns of wqkv.)
    qkv = jnp.dot(x2_bf, wqkv_ref[0], preferred_element_type=jnp.float32)  # [rows, 3D]

    # Relayout heads to a leading batch axis through a small bf16 scratch:
    # scratch rows [0, HB) = q heads, [HB, 2HB) = k heads, [2HB, 3HB) = v heads.
    for idx in range(3 * heads):
        c0 = idx * d_k
        piece = qkv[:, c0:c0 + d_k].reshape(bt, seq_len, d_k).astype(jnp.bfloat16)
        head_sc[idx * bt:(idx + 1) * bt] = piece

    q = head_sc[0:hb]                                             # [H*Bt, S, d_k] bf16
    k = head_sc[hb:2 * hb]
    v = head_sc[2 * hb:3 * hb]

    # ---- head-batched scores + softmax (f32 math) ----------------------------------
    s = jax.lax.dot_general(q, k, (((2,), (2,)), ((0,), (0,))),
                            preferred_element_type=jnp.float32)   # [H*Bt, S, S]
    bias = mask_ref[...] * jnp.float32(-1e9)                      # [Bt, 1, S]
    s4 = s.reshape(heads, bt, seq_len, seq_len) + bias[None]      # [H, Bt, S, S]
    s4 = s4 - jnp.max(s4, axis=-1, keepdims=True)
    e = jnp.exp(s4)
    inv = 1.0 / jnp.sum(e, axis=-1, keepdims=True)                # exact normalization
    attn = e * inv                                                # [H, Bt, S, S]
    attn_ref[0] = attn.astype(attn_ref.dtype)                     # bf16 writeback

    # ---- attn @ V, batched over all heads ------------------------------------------
    p = attn.reshape(hb, seq_len, seq_len).astype(jnp.bfloat16)
    ctx = jax.lax.dot_general(p, v, (((2,), (1,)), ((0,), (0,))),
                              preferred_element_type=jnp.float32)  # [H*Bt, S, d_k]

    # Merge heads back to [rows, D] through a scratch slab (static column offsets),
    # then a single full-width (K = D) output projection.
    for h in range(heads):
        ctx_sc[:, h * d_k:(h + 1) * d_k] = (
            ctx[h * bt:(h + 1) * bt].reshape(rows, d_k).astype(jnp.bfloat16))
    attn_out = jnp.dot(ctx_sc[...], wo_ref[0],
                       preferred_element_type=jnp.float32)         # [rows, D]

    # residual + LayerNorm 1 (f32)
    y = attn_out + x2
    mu = jnp.mean(y, axis=-1, keepdims=True)
    var = jnp.mean((y - mu) ** 2, axis=-1, keepdims=True)
    y = (y - mu) * jax.lax.rsqrt(var + eps)
    y = y * ln1g_ref[0] + ln1b_ref[0]

    # position-wise FFN: ReLU(y @ W1) @ W2, residual + LayerNorm 2
    h1 = jnp.maximum(jnp.dot(y.astype(jnp.bfloat16), w1_ref[0],
                             preferred_element_type=jnp.float32), 0.0)
    h2 = jnp.dot(h1.astype(jnp.bfloat16), w2_ref[0],
                 preferred_element_type=jnp.float32)
    z = h2 + y
    mu2 = jnp.mean(z, axis=-1, keepdims=True)
    var2 = jnp.mean((z - mu2) ** 2, axis=-1, keepdims=True)
    z = (z - mu2) * jax.lax.rsqrt(var2 + eps)
    z = z * ln2g_ref[0] + ln2b_ref[0]

    z3 = z.reshape(bt, seq_len, d_model)
    carry_ref[...] = z3                                            # feed the next layer

    @pl.when(l == n_layers - 1)
    def _():
        out_ref[...] = z3.astype(out_ref.dtype)


# ---------------------------------------------------------------------------
# Tiling / VMEM budgeting helpers.
# ---------------------------------------------------------------------------
def _vmem_limit_bytes():
    """Explicit VMEM budget from the hardware (v5e/v6e: 128 MiB, v7x: 64 MiB)."""
    cap = 64 * 1024 * 1024                       # conservative fallback (v7x physical)
    try:
        info = pltpu.get_tpu_info()
        cap = int(getattr(info, "vmem_capacity_bytes", cap))
    except Exception:
        pass
    cap = max(cap, 32 * 1024 * 1024)
    return int(min(cap * 0.85, 100 * 1024 * 1024))


def _vmem_bytes_estimate(bt, S, D, F, H):
    """Rough per-grid-step VMEM footprint (double-buffered blocks + scratch + temps)."""
    f32, bf16 = 4, 2
    rows = bt * S
    attn_blk = H * bt * S * S
    weights = (3 * D * D + D * D + D * F + F * D) * bf16 + 4 * D * f32
    pipelined = 2 * (rows * D * f32              # x block
                     + bt * S * f32              # mask block
                     + rows * D * f32            # out block
                     + attn_blk * bf16           # attn block (bf16)
                     + weights)
    scratch = rows * D * f32 + 3 * rows * D * bf16 + rows * D * bf16
    work = (rows * 3 * D * f32                   # packed qkv (f32)
            + 3 * attn_blk * f32                 # scores / exp / attn temporaries
            + rows * F * (f32 + bf16)            # ffn hidden
            + 4 * rows * D * f32)                # residual / LN temporaries
    return pipelined + scratch + work


def _pick_batch_tile(B, S, D, F, H, vmem_budget, row_target=512):
    """Largest Bt packing <= row_target token rows, fitting VMEM, with nb >= 2."""
    cap = max(1, row_target // S)
    if B >= 2:
        cap = min(cap, (B + 1) // 2)             # keep >= 2 chunks for v7x's 2 TCs
    cap = max(1, min(cap, B))
    bt = 1
    for c in range(1, cap + 1):
        if _vmem_bytes_estimate(c, S, D, F, H) <= vmem_budget:
            bt = c
    return bt


# ---------------------------------------------------------------------------
# Wrapper: embedding + compact pad mask (plain-JAX glue) + one fused pallas_call.
# ---------------------------------------------------------------------------
def encoder_forward(tokens, emb_weight, layer_params, heads, padding_idx,
                    attn_dtype=jnp.bfloat16):
    B, S = tokens.shape
    D = emb_weight.shape[1]
    L = len(layer_params)
    H = heads
    assert D % H == 0
    d_k = D // H
    F = layer_params[0]["w1"].shape[1]

    # --- plain-JAX glue: embedding gather + compact broadcastable pad mask ----------
    x = jnp.take(emb_weight, tokens, axis=0).astype(jnp.float32)        # [B, S, D]
    mask = (tokens == padding_idx).astype(jnp.float32)[:, None, :]      # [B, 1, S]

    # --- stack per-layer weights on a leading L axis ---------------------------------
    def stack(name):
        return jnp.stack([p[name] for p in layer_params], axis=0)

    scale = jnp.float32(1.0 / np.sqrt(d_k))
    wqkv = jnp.concatenate([stack("wq") * scale, stack("wk"), stack("wv")],
                           axis=2).astype(jnp.bfloat16)                 # [L, D, 3D]
    wo = stack("wo").astype(jnp.bfloat16)                               # [L, D, D]
    w1 = stack("w1").astype(jnp.bfloat16)                               # [L, D, F]
    w2 = stack("w2").astype(jnp.bfloat16)                               # [L, F, D]
    ln1g, ln1b = stack("ln1_g"), stack("ln1_b")                         # [L, 1, D] f32
    ln2g, ln2b = stack("ln2_g"), stack("ln2_b")

    # --- tiling & VMEM budget --------------------------------------------------------
    vmem_limit = _vmem_limit_bytes()
    Bt = _pick_batch_tile(B, S, D, F, H, int(vmem_limit * 0.8))
    nb = -(-B // Bt)
    B_pad = nb * Bt
    if B_pad > B:
        x = jnp.pad(x, ((0, B_pad - B), (0, 0), (0, 0)))
        mask = jnp.pad(mask, ((0, B_pad - B), (0, 0), (0, 0)), constant_values=1.0)

    kernel = functools.partial(encoder_stack_kernel,
                               heads=H, d_k=d_k, seq_len=S, bt=Bt)

    def layer_spec(shape):                             # weight blocks: pick layer l only
        zeros = (0,) * (len(shape) - 1)
        return pl.BlockSpec(shape, lambda b, l: (l,) + zeros)

    out, attn_raw = pl.pallas_call(
        kernel,
        out_shape=(jax.ShapeDtypeStruct((B_pad, S, D), jnp.float32),
                   jax.ShapeDtypeStruct((L, H, B_pad, S, S), attn_dtype)),
        grid_spec=pltpu.PrefetchScalarGridSpec(
            num_scalar_prefetch=0,
            grid=(nb, L),                                            # layer axis innermost
            in_specs=[
                pl.BlockSpec((Bt, S, D), lambda b, l: (b, 0, 0)),    # embeddings
                pl.BlockSpec((Bt, 1, S), lambda b, l: (b, 0, 0)),    # compact pad mask
                layer_spec((1, D, 3 * D)),                           # packed Wq|Wk|Wv
                layer_spec((1, D, D)),                               # Wo
                layer_spec((1, 1, D)),                               # ln1 gamma
                layer_spec((1, 1, D)),                               # ln1 beta
                layer_spec((1, D, F)),                               # W1
                layer_spec((1, F, D)),                               # W2
                layer_spec((1, 1, D)),                               # ln2 gamma
                layer_spec((1, 1, D)),                               # ln2 beta
            ],
            out_specs=[
                pl.BlockSpec((Bt, S, D), lambda b, l: (b, 0, 0)),    # final activations
                pl.BlockSpec((1, H, Bt, S, S), lambda b, l: (l, 0, b, 0, 0)),
            ],
            scratch_shapes=[
                pltpu.VMEM((Bt, S, D), jnp.float32),                 # layer-to-layer carry
                pltpu.VMEM((3 * H * Bt, S, d_k), jnp.bfloat16),      # head-batched q/k/v
                pltpu.VMEM((Bt * S, D), jnp.bfloat16),               # merged-head context
            ],
        ),
        compiler_params=pltpu.CompilerParams(
            dimension_semantics=("parallel", "arbitrary"),
            vmem_limit_bytes=vmem_limit),
    )(x, mask, wqkv, wo, ln1g, ln1b, w1, w2, ln2g, ln2b)

    out = out[:B]
    # Module layout: list (per layer) of [B, H, S, S] (bf16 unless attn_dtype overridden).
    attns = [attn_raw[l, :, :B].transpose(1, 0, 2, 3) for l in range(L)]
    return out, attns


# ---------------------------------------------------------------------------
# Pure-JAX f32 reference (mirrors the PyTorch semantics) for a correctness check.
# ---------------------------------------------------------------------------
def _layer_ref(x, mask, p, heads, eps=1e-5):
    B, S, D = x.shape
    d_k = D // heads
    q = (x @ p["wq"]).reshape(B, S, heads, d_k).transpose(0, 2, 1, 3)
    k = (x @ p["wk"]).reshape(B, S, heads, d_k).transpose(0, 2, 1, 3)
    v = (x @ p["wv"]).reshape(B, S, heads, d_k).transpose(0, 2, 1, 3)
    scores = jnp.einsum("bhqd,bhkd->bhqk", q, k) / jnp.sqrt(jnp.float32(d_k))
    scores = jnp.where(mask[:, None, :, :] > 0, -1e9, scores)
    attn = jax.nn.softmax(scores, axis=-1)
    ctx = jnp.einsum("bhqk,bhkd->bhqd", attn, v).transpose(0, 2, 1, 3).reshape(B, S, D)
    y = ctx @ p["wo"] + x
    mu = y.mean(-1, keepdims=True)
    var = ((y - mu) ** 2).mean(-1, keepdims=True)
    y = (y - mu) / jnp.sqrt(var + eps) * p["ln1_g"] + p["ln1_b"]
    h = jnp.maximum(y @ p["w1"], 0.0) @ p["w2"]
    z = h + y
    mu2 = z.mean(-1, keepdims=True)
    var2 = ((z - mu2) ** 2).mean(-1, keepdims=True)
    z = (z - mu2) / jnp.sqrt(var2 + eps) * p["ln2_g"] + p["ln2_b"]
    return z, attn


def _encoder_ref(tokens, emb_weight, layer_params, heads, padding_idx):
    x = jnp.take(emb_weight, tokens, axis=0)
    B, S = tokens.shape
    pad = (tokens == padding_idx)
    mask = jnp.broadcast_to(pad[:, None, :], (B, S, S)).astype(jnp.float32)
    attns = []
    for p in layer_params:
        x, a = _layer_ref(x, mask, p, heads)
        attns.append(a)
    return x, attns


# ---------------------------------------------------------------------------
# Deterministic parameter construction (synthetic init, no checkpoint).
# ---------------------------------------------------------------------------
def make_params(key, vocab, d_model, heads, ff_size, n_layers):
    keys = jax.random.split(key, 1 + n_layers)
    # src_emb: normal(0, d_model**-0.5) — matches Encoder.reset_parameters
    emb = jax.random.normal(keys[0], (vocab, d_model), jnp.float32) * (d_model ** -0.5)
    layers = []
    for li in range(n_layers):
        ks = jax.random.split(keys[1 + li], 6)
        s_d = 1.0 / np.sqrt(d_model)
        s_f = 1.0 / np.sqrt(ff_size)
        layers.append(dict(
            wq=jax.random.normal(ks[0], (d_model, d_model), jnp.float32) * s_d,
            wk=jax.random.normal(ks[1], (d_model, d_model), jnp.float32) * s_d,
            wv=jax.random.normal(ks[2], (d_model, d_model), jnp.float32) * s_d,
            wo=jax.random.normal(ks[3], (d_model, d_model), jnp.float32) * s_d,
            ln1_g=jnp.ones((1, d_model), jnp.float32),
            ln1_b=jnp.zeros((1, d_model), jnp.float32),
            w1=jax.random.normal(ks[4], (d_model, ff_size), jnp.float32) * s_d,
            w2=jax.random.normal(ks[5], (ff_size, d_model), jnp.float32) * s_f,
            ln2_g=jnp.ones((1, d_model), jnp.float32),
            ln2_b=jnp.zeros((1, d_model), jnp.float32),
        ))
    return emb, layers


if __name__ == "__main__":
    # Small shapes consistent with the module: opt.embedding_dim=32, opt.heads=4,
    # opt.ff_size=64, opt.layers=2, src_vocab_size=50, padding_idx=0.
    B, S, D, H, F, L = 2, 8, 32, 4, 64, 2
    VOCAB, PAD = 50, 0

    key = jax.random.PRNGKey(0)
    k_tok, k_par = jax.random.split(key)
    tokens = jax.random.randint(k_tok, (B, S), 1, VOCAB, dtype=jnp.int32)
    tokens = tokens.at[:, -2:].set(PAD)          # some padding to exercise the mask

    emb, layer_params = make_params(k_par, VOCAB, D, H, F, L)

    out, attns = encoder_forward(tokens, emb, layer_params, H, PAD)
    out = jax.block_until_ready(out)
    attns = [jax.block_until_ready(a) for a in attns]

    # Correctness check vs the pure-f32 JAX reference. Tolerances are loosened because
    # the kernel feeds the MXU bf16 operands and emits bf16 attention maps; the check
    # still catches masking / head-mixing / residual / LayerNorm bugs.
    ref_out, ref_attns = _encoder_ref(tokens, emb, layer_params, H, PAD)
    np.testing.assert_allclose(np.asarray(out), np.asarray(ref_out), atol=5e-2, rtol=5e-2)
    for a, ra in zip(attns, ref_attns):
        np.testing.assert_allclose(np.asarray(a.astype(jnp.float32)), np.asarray(ra),
                                   atol=3e-2, rtol=3e-2)

    print("KERNEL_OK")
</pallas_src>

<mosaic_0001>
module attributes {stable_mosaic.version = 11 : i64} {
  func.func @encoder_stack_kernel(%arg0: i32, %arg1: i32, %arg2: memref<1x8x32xf32, #tpu.memory_space<vmem>>, %arg3: memref<1x1x8xf32, #tpu.memory_space<vmem>>, %arg4: memref<1x32x96xbf16, #tpu.memory_space<vmem>>, %arg5: memref<1x32x32xbf16, #tpu.memory_space<vmem>>, %arg6: memref<1x1x32xf32, #tpu.memory_space<vmem>>, %arg7: memref<1x1x32xf32, #tpu.memory_space<vmem>>, %arg8: memref<1x32x64xbf16, #tpu.memory_space<vmem>>, %arg9: memref<1x64x32xbf16, #tpu.memory_space<vmem>>, %arg10: memref<1x1x32xf32, #tpu.memory_space<vmem>>, %arg11: memref<1x1x32xf32, #tpu.memory_space<vmem>>, %arg12: memref<1x8x32xf32, #tpu.memory_space<vmem>>, %arg13: memref<1x4x1x8x8xbf16, #tpu.memory_space<vmem>>, %arg14: memref<1x8x32xf32, #tpu.memory_space<vmem>>, %arg15: memref<12x8x8xbf16, #tpu.memory_space<vmem>>, %arg16: memref<8x32xbf16, #tpu.memory_space<vmem>>) attributes {dimension_semantics = [#tpu.dimension_semantics<parallel>, #tpu.dimension_semantics<arbitrary>], iteration_bounds = array<i64: 2, 2>, scalar_prefetch = 0 : i64, scratch_operands = 3 : i64, tpu.core_type = #tpu.core_type<tc>, window_params = [{transform_indices = @transform_0, window_bounds = array<i64: 1, 8, 32>}, {transform_indices = @transform_1, window_bounds = array<i64: 1, 1, 8>}, {transform_indices = @transform_2, window_bounds = array<i64: 1, 32, 96>}, {transform_indices = @transform_3, window_bounds = array<i64: 1, 32, 32>}, {transform_indices = @transform_4, window_bounds = array<i64: 1, 1, 32>}, {transform_indices = @transform_5, window_bounds = array<i64: 1, 1, 32>}, {transform_indices = @transform_6, window_bounds = array<i64: 1, 32, 64>}, {transform_indices = @transform_7, window_bounds = array<i64: 1, 64, 32>}, {transform_indices = @transform_8, window_bounds = array<i64: 1, 1, 32>}, {transform_indices = @transform_9, window_bounds = array<i64: 1, 1, 32>}, {transform_indices = @transform_10, window_bounds = array<i64: 1, 8, 32>}, {transform_indices = @transform_11, window_bounds = array<i64: 1, 4, 1, 8, 8>}]} {
    %c0_i32 = arith.constant 0 : i32
    %0 = arith.cmpi eq, %arg1, %c0_i32 : i32
    %1 = arith.extui %0 : i1 to i32
    %c0_i32_0 = arith.constant 0 : i32
    %2 = arith.cmpi ne, %1, %c0_i32_0 : i32
    scf.if %2 {
      %c0_101 = arith.constant 0 : index
      %c0_102 = arith.constant 0 : index
      %c0_103 = arith.constant 0 : index
      %175 = vector.load %arg2[%c0_101, %c0_102, %c0_103] : memref<1x8x32xf32, #tpu.memory_space<vmem>>, vector<1x8x32xf32>
      %c0_104 = arith.constant 0 : index
      %c0_105 = arith.constant 0 : index
      %c0_106 = arith.constant 0 : index
      %176 = vector.load %arg14[%c0_104, %c0_105, %c0_106] : memref<1x8x32xf32, #tpu.memory_space<vmem>>, vector<1x8x32xf32>
      tpu.vector_store %arg14[%c0_104, %c0_105, %c0_106], %175 {strides = array<i32>} : memref<1x8x32xf32, #tpu.memory_space<vmem>>, vector<1x8x32xf32>,
    } else {
    }
    %c0 = arith.constant 0 : index
    %c0_1 = arith.constant 0 : index
    %c0_2 = arith.constant 0 : index
    %3 = vector.load %arg14[%c0, %c0_1, %c0_2] : memref<1x8x32xf32, #tpu.memory_space<vmem>>, vector<1x8x32xf32>
    %4 = vector.shape_cast %3 : vector<1x8x32xf32> to vector<8x32xf32>
    %5 = arith.truncf %4 : vector<8x32xf32> to vector<8x32xbf16>
    %c0_3 = arith.constant 0 : index
    %c0_4 = arith.constant 0 : index
    %c0_5 = arith.constant 0 : index
    %6 = vector.load %arg4[%c0_3, %c0_4, %c0_5] : memref<1x32x96xbf16, #tpu.memory_space<vmem>>, vector<1x32x96xbf16>
    %7 = vector.shape_cast %6 : vector<1x32x96xbf16> to vector<32x96xbf16>
    %cst = arith.constant dense<0.000000e+00> : vector<8x96xf32>
    %8 = tpu.matmul %5, %7, %cst {dimension_numbers = #tpu.dot_dimension_numbers<[1], [0], [0], [1], [0, 0, 1, 1], [], []>} : vector<8x32xbf16>, vector<32x96xbf16>, vector<8x96xf32> -> vector<8x96xf32>
    %9 = vector.extract_strided_slice %8 {offsets = [0, 0], sizes = [8, 8], strides = [1, 1]} : vector<8x96xf32> to vector<8x8xf32>
    %10 = vector.shape_cast %9 : vector<8x8xf32> to vector<1x8x8xf32>
    %11 = arith.truncf %10 : vector<1x8x8xf32> to vector<1x8x8xbf16>
    %c0_6 = arith.constant 0 : index
    %c0_7 = arith.constant 0 : index
    %c0_8 = arith.constant 0 : index
    %12 = vector.load %arg15[%c0_6, %c0_7, %c0_8] : memref<12x8x8xbf16, #tpu.memory_space<vmem>>, vector<1x8x8xbf16>
    tpu.vector_store %arg15[%c0_6, %c0_7, %c0_8], %11 {strides = array<i32>} : memref<12x8x8xbf16, #tpu.memory_space<vmem>>, vector<1x8x8xbf16>,
    %13 = vector.extract_strided_slice %8 {offsets = [0, 8], sizes = [8, 8], strides = [1, 1]} : vector<8x96xf32> to vector<8x8xf32>
    %14 = vector.shape_cast %13 : vector<8x8xf32> to vector<1x8x8xf32>
    %15 = arith.truncf %14 : vector<1x8x8xf32> to vector<1x8x8xbf16>
    %c1 = arith.constant 1 : index
    %c0_9 = arith.constant 0 : index
    %c0_10 = arith.constant 0 : index
    %16 = vector.load %arg15[%c1, %c0_9, %c0_10] : memref<12x8x8xbf16, #tpu.memory_space<vmem>>, vector<1x8x8xbf16>
    tpu.vector_store %arg15[%c1, %c0_9, %c0_10], %15 {strides = array<i32>} : memref<12x8x8xbf16, #tpu.memory_space<vmem>>, vector<1x8x8xbf16>,
    %17 = vector.extract_strided_slice %8 {offsets = [0, 16], sizes = [8, 8], strides = [1, 1]} : vector<8x96xf32> to vector<8x8xf32>
    %18 = vector.shape_cast %17 : vector<8x8xf32> to vector<1x8x8xf32>
    %19 = arith.truncf %18 : vector<1x8x8xf32> to vector<1x8x8xbf16>
    %c2 = arith.constant 2 : index
    %c0_11 = arith.constant 0 : index
    %c0_12 = arith.constant 0 : index
    %20 = vector.load %arg15[%c2, %c0_11, %c0_12] : memref<12x8x8xbf16, #tpu.memory_space<vmem>>, vector<1x8x8xbf16>
    tpu.vector_store %arg15[%c2, %c0_11, %c0_12], %19 {strides = array<i32>} : memref<12x8x8xbf16, #tpu.memory_space<vmem>>, vector<1x8x8xbf16>,
    %21 = vector.extract_strided_slice %8 {offsets = [0, 24], sizes = [8, 8], strides = [1, 1]} : vector<8x96xf32> to vector<8x8xf32>
    %22 = vector.shape_cast %21 : vector<8x8xf32> to vector<1x8x8xf32>
    %23 = arith.truncf %22 : vector<1x8x8xf32> to vector<1x8x8xbf16>
    %c3 = arith.constant 3 : index
    %c0_13 = arith.constant 0 : index
    %c0_14 = arith.constant 0 : index
    %24 = vector.load %arg15[%c3, %c0_13, %c0_14] : memref<12x8x8xbf16, #tpu.memory_space<vmem>>, vector<1x8x8xbf16>
    tpu.vector_store %arg15[%c3, %c0_13, %c0_14], %23 {strides = array<i32>} : memref<12x8x8xbf16, #tpu.memory_space<vmem>>, vector<1x8x8xbf16>,
    %25 = vector.extract_strided_slice %8 {offsets = [0, 32], sizes = [8, 8], strides = [1, 1]} : vector<8x96xf32> to vector<8x8xf32>
    %26 = vector.shape_cast %25 : vector<8x8xf32> to vector<1x8x8xf32>
    %27 = arith.truncf %26 : vector<1x8x8xf32> to vector<1x8x8xbf16>
    %c4 = arith.constant 4 : index
    %c0_15 = arith.constant 0 : index
    %c0_16 = arith.constant 0 : index
    %28 = vector.load %arg15[%c4, %c0_15, %c0_16] : memref<12x8x8xbf16, #tpu.memory_space<vmem>>, vector<1x8x8xbf16>
    tpu.vector_store %arg15[%c4, %c0_15, %c0_16], %27 {strides = array<i32>} : memref<12x8x8xbf16, #tpu.memory_space<vmem>>, vector<1x8x8xbf16>,
    %29 = vector.extract_strided_slice %8 {offsets = [0, 40], sizes = [8, 8], strides = [1, 1]} : vector<8x96xf32> to vector<8x8xf32>
    %30 = vector.shape_cast %29 : vector<8x8xf32> to vector<1x8x8xf32>
    %31 = arith.truncf %30 : vector<1x8x8xf32> to vector<1x8x8xbf16>
    %c5 = arith.constant 5 : index
    %c0_17 = arith.constant 0 : index
    %c0_18 = arith.constant 0 : index
    %32 = vector.load %arg15[%c5, %c0_17, %c0_18] : memref<12x8x8xbf16, #tpu.memory_space<vmem>>, vector<1x8x8xbf16>
    tpu.vector_store %arg15[%c5, %c0_17, %c0_18], %31 {strides = array<i32>} : memref<12x8x8xbf16, #tpu.memory_space<vmem>>, vector<1x8x8xbf16>,
    %33 = vector.extract_strided_slice %8 {offsets = [0, 48], sizes = [8, 8], strides = [1, 1]} : vector<8x96xf32> to vector<8x8xf32>
    %34 = vector.shape_cast %33 : vector<8x8xf32> to vector<1x8x8xf32>
    %35 = arith.truncf %34 : vector<1x8x8xf32> to vector<1x8x8xbf16>
    %c6 = arith.constant 6 : index
    %c0_19 = arith.constant 0 : index
    %c0_20 = arith.constant 0 : index
    %36 = vector.load %arg15[%c6, %c0_19, %c0_20] : memref<12x8x8xbf16, #tpu.memory_space<vmem>>, vector<1x8x8xbf16>
    tpu.vector_store %arg15[%c6, %c0_19, %c0_20], %35 {strides = array<i32>} : memref<12x8x8xbf16, #tpu.memory_space<vmem>>, vector<1x8x8xbf16>,
    %37 = vector.extract_strided_slice %8 {offsets = [0, 56], sizes = [8, 8], strides = [1, 1]} : vector<8x96xf32> to vector<8x8xf32>
    %38 = vector.shape_cast %37 : vector<8x8xf32> to vector<1x8x8xf32>
    %39 = arith.truncf %38 : vector<1x8x8xf32> to vector<1x8x8xbf16>
    %c7 = arith.constant 7 : index
    %c0_21 = arith.constant 0 : index
    %c0_22 = arith.constant 0 : index
    %40 = vector.load %arg15[%c7, %c0_21, %c0_22] : memref<12x8x8xbf16, #tpu.memory_space<vmem>>, vector<1x8x8xbf16>
    tpu.vector_store %arg15[%c7, %c0_21, %c0_22], %39 {strides = array<i32>} : memref<12x8x8xbf16, #tpu.memory_space<vmem>>, vector<1x8x8xbf16>,
    %41 = vector.extract_strided_slice %8 {offsets = [0, 64], sizes = [8, 8], strides = [1, 1]} : vector<8x96xf32> to vector<8x8xf32>
    %42 = vector.shape_cast %41 : vector<8x8xf32> to vector<1x8x8xf32>
    %43 = arith.truncf %42 : vector<1x8x8xf32> to vector<1x8x8xbf16>
    %c8 = arith.constant 8 : index
    %c0_23 = arith.constant 0 : index
    %c0_24 = arith.constant 0 : index
    %44 = vector.load %arg15[%c8, %c0_23, %c0_24] : memref<12x8x8xbf16, #tpu.memory_space<vmem>>, vector<1x8x8xbf16>
    tpu.vector_store %arg15[%c8, %c0_23, %c0_24], %43 {strides = array<i32>} : memref<12x8x8xbf16, #tpu.memory_space<vmem>>, vector<1x8x8xbf16>,
    %45 = vector.extract_strided_slice %8 {offsets = [0, 72], sizes = [8, 8], strides = [1, 1]} : vector<8x96xf32> to vector<8x8xf32>
    %46 = vector.shape_cast %45 : vector<8x8xf32> to vector<1x8x8xf32>
    %47 = arith.truncf %46 : vector<1x8x8xf32> to vector<1x8x8xbf16>
    %c9 = arith.constant 9 : index
    %c0_25 = arith.constant 0 : index
    %c0_26 = arith.constant 0 : index
    %48 = vector.load %arg15[%c9, %c0_25, %c0_26] : memref<12x8x8xbf16, #tpu.memory_space<vmem>>, vector<1x8x8xbf16>
    tpu.vector_store %arg15[%c9, %c0_25, %c0_26], %47 {strides = array<i32>} : memref<12x8x8xbf16, #tpu.memory_space<vmem>>, vector<1x8x8xbf16>,
    %49 = vector.extract_strided_slice %8 {offsets = [0, 80], sizes = [8, 8], strides = [1, 1]} : vector<8x96xf32> to vector<8x8xf32>
    %50 = vector.shape_cast %49 : vector<8x8xf32> to vector<1x8x8xf32>
    %51 = arith.truncf %50 : vector<1x8x8xf32> to vector<1x8x8xbf16>
    %c10 = arith.constant 10 : index
    %c0_27 = arith.constant 0 : index
    %c0_28 = arith.constant 0 : index
    %52 = vector.load %arg15[%c10, %c0_27, %c0_28] : memref<12x8x8xbf16, #tpu.memory_space<vmem>>, vector<1x8x8xbf16>
    tpu.vector_store %arg15[%c10, %c0_27, %c0_28], %51 {strides = array<i32>} : memref<12x8x8xbf16, #tpu.memory_space<vmem>>, vector<1x8x8xbf16>,
    %53 = vector.extract_strided_slice %8 {offsets = [0, 88], sizes = [8, 8], strides = [1, 1]} : vector<8x96xf32> to vector<8x8xf32>
    %54 = vector.shape_cast %53 : vector<8x8xf32> to vector<1x8x8xf32>
    %55 = arith.truncf %54 : vector<1x8x8xf32> to vector<1x8x8xbf16>
    %c11 = arith.constant 11 : index
    %c0_29 = arith.constant 0 : index
    %c0_30 = arith.constant 0 : index
    %56 = vector.load %arg15[%c11, %c0_29, %c0_30] : memref<12x8x8xbf16, #tpu.memory_space<vmem>>, vector<1x8x8xbf16>
    tpu.vector_store %arg15[%c11, %c0_29, %c0_30], %55 {strides = array<i32>} : memref<12x8x8xbf16, #tpu.memory_space<vmem>>, vector<1x8x8xbf16>,
    %c0_31 = arith.constant 0 : index
    %c0_32 = arith.constant 0 : index
    %c0_33 = arith.constant 0 : index
    %57 = vector.load %arg15[%c0_31, %c0_32, %c0_33] : memref<12x8x8xbf16, #tpu.memory_space<vmem>>, vector<4x8x8xbf16>
    %c4_34 = arith.constant 4 : index
    %c0_35 = arith.constant 0 : index
    %c0_36 = arith.constant 0 : index
    %58 = vector.load %arg15[%c4_34, %c0_35, %c0_36] : memref<12x8x8xbf16, #tpu.memory_space<vmem>>, vector<4x8x8xbf16>
    %c8_37 = arith.constant 8 : index
    %c0_38 = arith.constant 0 : index
    %c0_39 = arith.constant 0 : index
    %59 = vector.load %arg15[%c8_37, %c0_38, %c0_39] : memref<12x8x8xbf16, #tpu.memory_space<vmem>>, vector<4x8x8xbf16>
    %cst_40 = arith.constant dense<0.000000e+00> : vector<4x8x8xf32>
    %60 = tpu.matmul %57, %58, %cst_40 {dimension_numbers = #tpu.dot_dimension_numbers<[2], [2], [1], [1], [0, 0, 0, 1, 1, 1], [0], [0]>} : vector<4x8x8xbf16>, vector<4x8x8xbf16>, vector<4x8x8xf32> -> vector<4x8x8xf32>
    %c0_41 = arith.constant 0 : index
    %c0_42 = arith.constant 0 : index
    %c0_43 = arith.constant 0 : index
    %61 = vector.load %arg3[%c0_41, %c0_42, %c0_43] : memref<1x1x8xf32, #tpu.memory_space<vmem>>, vector<1x1x8xf32>
    %cst_44 = arith.constant -1.000000e+09 : f32
    %62 = vector.broadcast %cst_44 : f32 to vector<1x1x8xf32>
    %63 = arith.mulf %61, %62 : vector<1x1x8xf32>
    %64 = vector.shape_cast %60 : vector<4x8x8xf32> to vector<4x1x8x8xf32>
    %65 = vector.shape_cast %63 : vector<1x1x8xf32> to vector<1x1x1x8xf32>
    %66 = vector.broadcast %65 : vector<1x1x1x8xf32> to vector<4x1x8x8xf32>
    %67 = arith.addf %64, %66 : vector<4x1x8x8xf32>
    %cst_45 = arith.constant dense<0xFF800000> : vector<4x1x8xf32>
    %68 = vector.multi_reduction <maximumf>, %67, %cst_45 [3] : vector<4x1x8x8xf32> to vector<4x1x8xf32>
    %69 = vector.shape_cast %68 : vector<4x1x8xf32> to vector<4x1x8x1xf32>
    %70 = vector.broadcast %69 : vector<4x1x8x1xf32> to vector<4x1x8x8xf32>
    %71 = arith.subf %67, %70 : vector<4x1x8x8xf32>
    %72 = math.exp %71 : vector<4x1x8x8xf32>
    %cst_46 = arith.constant dense<0.000000e+00> : vector<4x1x8xf32>
    %73 = vector.multi_reduction <add>, %72, %cst_46 [3] : vector<4x1x8x8xf32> to vector<4x1x8xf32>
    %74 = vector.shape_cast %73 : vector<4x1x8xf32> to vector<4x1x8x1xf32>
    %cst_47 = arith.constant 1.000000e+00 : f32
    %75 = vector.broadcast %cst_47 : f32 to vector<4x1x8x1xf32>
    %76 = arith.divf %75, %74 : vector<4x1x8x1xf32>
    %77 = vector.broadcast %76 : vector<4x1x8x1xf32> to vector<4x1x8x8xf32>
    %78 = arith.mulf %72, %77 : vector<4x1x8x8xf32>
    %79 = arith.truncf %78 : vector<4x1x8x8xf32> to vector<4x1x8x8xbf16>
    %c0_48 = arith.constant 0 : index
    %c0_49 = arith.constant 0 : index
    %c0_50 = arith.constant 0 : index
    %c0_51 = arith.constant 0 : index
    %c0_52 = arith.constant 0 : index
    %80 = vector.load %arg13[%c0_48, %c0_49, %c0_50, %c0_51, %c0_52] : memref<1x4x1x8x8xbf16, #tpu.memory_space<vmem>>, vector<1x4x1x8x8xbf16>
    %81 = vector.shape_cast %80 : vector<1x4x1x8x8xbf16> to vector<4x1x8x8xbf16>
    %82 = vector.shape_cast %79 : vector<4x1x8x8xbf16> to vector<1x4x1x8x8xbf16>
    tpu.vector_store %arg13[%c0_48, %c0_49, %c0_50, %c0_51, %c0_52], %82 {strides = array<i32>} : memref<1x4x1x8x8xbf16, #tpu.memory_space<vmem>>, vector<1x4x1x8x8xbf16>,
    %83 = vector.shape_cast %78 : vector<4x1x8x8xf32> to vector<4x8x8xf32>
    %84 = arith.truncf %83 : vector<4x8x8xf32> to vector<4x8x8xbf16>
    %cst_53 = arith.constant dense<0.000000e+00> : vector<4x8x8xf32>
    %85 = tpu.matmul %84, %59, %cst_53 {dimension_numbers = #tpu.dot_dimension_numbers<[2], [1], [1], [2], [0, 0, 0, 1, 1, 2], [0], [0]>} : vector<4x8x8xbf16>, vector<4x8x8xbf16>, vector<4x8x8xf32> -> vector<4x8x8xf32>
    %86 = vector.extract_strided_slice %85 {offsets = [0, 0, 0], sizes = [1, 8, 8], strides = [1, 1, 1]} : vector<4x8x8xf32> to vector<1x8x8xf32>
    %87 = vector.shape_cast %86 : vector<1x8x8xf32> to vector<8x8xf32>
    %88 = arith.truncf %87 : vector<8x8xf32> to vector<8x8xbf16>
    %c0_54 = arith.constant 0 : index
    %c0_55 = arith.constant 0 : index
    %89 = vector.load %arg16[%c0_54, %c0_55] : memref<8x32xbf16, #tpu.memory_space<vmem>>, vector<8x8xbf16>
    tpu.vector_store %arg16[%c0_54, %c0_55], %88 {strides = array<i32>} : memref<8x32xbf16, #tpu.memory_space<vmem>>, vector<8x8xbf16>,
    %90 = vector.extract_strided_slice %85 {offsets = [1, 0, 0], sizes = [1, 8, 8], strides = [1, 1, 1]} : vector<4x8x8xf32> to vector<1x8x8xf32>
    %91 = vector.shape_cast %90 : vector<1x8x8xf32> to vector<8x8xf32>
    %92 = arith.truncf %91 : vector<8x8xf32> to vector<8x8xbf16>
    %c0_56 = arith.constant 0 : index
    %c8_57 = arith.constant 8 : index
    %93 = vector.load %arg16[%c0_56, %c8_57] : memref<8x32xbf16, #tpu.memory_space<vmem>>, vector<8x8xbf16>
    tpu.vector_store %arg16[%c0_56, %c8_57], %92 {strides = array<i32>} : memref<8x32xbf16, #tpu.memory_space<vmem>>, vector<8x8xbf16>,
    %94 = vector.extract_strided_slice %85 {offsets = [2, 0, 0], sizes = [1, 8, 8], strides = [1, 1, 1]} : vector<4x8x8xf32> to vector<1x8x8xf32>
    %95 = vector.shape_cast %94 : vector<1x8x8xf32> to vector<8x8xf32>
    %96 = arith.truncf %95 : vector<8x8xf32> to vector<8x8xbf16>
    %c0_58 = arith.constant 0 : index
    %c16 = arith.constant 16 : index
    %97 = vector.load %arg16[%c0_58, %c16] : memref<8x32xbf16, #tpu.memory_space<vmem>>, vector<8x8xbf16>
    tpu.vector_store %arg16[%c0_58, %c16], %96 {strides = array<i32>} : memref<8x32xbf16, #tpu.memory_space<vmem>>, vector<8x8xbf16>,
    %98 = vector.extract_strided_slice %85 {offsets = [3, 0, 0], sizes = [1, 8, 8], strides = [1, 1, 1]} : vector<4x8x8xf32> to vector<1x8x8xf32>
    %99 = vector.shape_cast %98 : vector<1x8x8xf32> to vector<8x8xf32>
    %100 = arith.truncf %99 : vector<8x8xf32> to vector<8x8xbf16>
    %c0_59 = arith.constant 0 : index
    %c24 = arith.constant 24 : index
    %101 = vector.load %arg16[%c0_59, %c24] : memref<8x32xbf16, #tpu.memory_space<vmem>>, vector<8x8xbf16>
    tpu.vector_store %arg16[%c0_59, %c24], %100 {strides = array<i32>} : memref<8x32xbf16, #tpu.memory_space<vmem>>, vector<8x8xbf16>,
    %c0_60 = arith.constant 0 : index
    %c0_61 = arith.constant 0 : index
    %102 = vector.load %arg16[%c0_60, %c0_61] : memref<8x32xbf16, #tpu.memory_space<vmem>>, vector<8x32xbf16>
    %c0_62 = arith.constant 0 : index
    %c0_63 = arith.constant 0 : index
    %c0_64 = arith.constant 0 : index
    %103 = vector.load %arg5[%c0_62, %c0_63, %c0_64] : memref<1x32x32xbf16, #tpu.memory_space<vmem>>, vector<1x32x32xbf16>
    %104 = vector.shape_cast %103 : vector<1x32x32xbf16> to vector<32x32xbf16>
    %cst_65 = arith.constant dense<0.000000e+00> : vector<8x32xf32>
    %105 = tpu.matmul %102, %104, %cst_65 {dimension_numbers = #tpu.dot_dimension_numbers<[1], [0], [0], [1], [0, 0, 1, 1], [], []>} : vector<8x32xbf16>, vector<32x32xbf16>, vector<8x32xf32> -> vector<8x32xf32>
    %106 = arith.addf %105, %4 : vector<8x32xf32>
    %cst_66 = arith.constant dense<0.000000e+00> : vector<8xf32>
    %107 = vector.multi_reduction <add>, %106, %cst_66 [1] : vector<8x32xf32> to vector<8xf32>
    %108 = vector.shape_cast %107 : vector<8xf32> to vector<8x1xf32>
    %cst_67 = arith.constant 3.200000e+01 : f32
    %109 = vector.broadcast %cst_67 : f32 to vector<8x1xf32>
    %110 = arith.divf %108, %109 : vector<8x1xf32>
    %111 = vector.broadcast %110 : vector<8x1xf32> to vector<8x32xf32>
    %112 = arith.subf %106, %111 : vector<8x32xf32>
    %113 = arith.mulf %112, %112 : vector<8x32xf32>
    %cst_68 = arith.constant dense<0.000000e+00> : vector<8xf32>
    %114 = vector.multi_reduction <add>, %113, %cst_68 [1] : vector<8x32xf32> to vector<8xf32>
    %115 = vector.shape_cast %114 : vector<8xf32> to vector<8x1xf32>
    %cst_69 = arith.constant 3.200000e+01 : f32
    %116 = vector.broadcast %cst_69 : f32 to vector<8x1xf32>
    %117 = arith.divf %115, %116 : vector<8x1xf32>
    %118 = vector.broadcast %110 : vector<8x1xf32> to vector<8x32xf32>
    %119 = arith.subf %106, %118 : vector<8x32xf32>
    %cst_70 = arith.constant 9.99999974E-6 : f32
    %120 = vector.broadcast %cst_70 : f32 to vector<8x1xf32>
    %121 = arith.addf %117, %120 : vector<8x1xf32>
    %122 = math.rsqrt %121 : vector<8x1xf32>
    %123 = vector.broadcast %122 : vector<8x1xf32> to vector<8x32xf32>
    %124 = arith.mulf %119, %123 : vector<8x32xf32>
    %c0_71 = arith.constant 0 : index
    %c0_72 = arith.constant 0 : index
    %c0_73 = arith.constant 0 : index
    %125 = vector.load %arg6[%c0_71, %c0_72, %c0_73] : memref<1x1x32xf32, #tpu.memory_space<vmem>>, vector<1x1x32xf32>
    %126 = vector.shape_cast %125 : vector<1x1x32xf32> to vector<1x32xf32>
    %127 = vector.broadcast %126 : vector<1x32xf32> to vector<8x32xf32>
    %128 = arith.mulf %124, %127 : vector<8x32xf32>
    %c0_74 = arith.constant 0 : index
    %c0_75 = arith.constant 0 : index
    %c0_76 = arith.constant 0 : index
    %129 = vector.load %arg7[%c0_74, %c0_75, %c0_76] : memref<1x1x32xf32, #tpu.memory_space<vmem>>, vector<1x1x32xf32>
    %130 = vector.shape_cast %129 : vector<1x1x32xf32> to vector<1x32xf32>
    %131 = vector.broadcast %130 : vector<1x32xf32> to vector<8x32xf32>
    %132 = arith.addf %128, %131 : vector<8x32xf32>
    %133 = arith.truncf %132 : vector<8x32xf32> to vector<8x32xbf16>
    %c0_77 = arith.constant 0 : index
    %c0_78 = arith.constant 0 : index
    %c0_79 = arith.constant 0 : index
    %134 = vector.load %arg8[%c0_77, %c0_78, %c0_79] : memref<1x32x64xbf16, #tpu.memory_space<vmem>>, vector<1x32x64xbf16>
    %135 = vector.shape_cast %134 : vector<1x32x64xbf16> to vector<32x64xbf16>
    %cst_80 = arith.constant dense<0.000000e+00> : vector<8x64xf32>
    %136 = tpu.matmul %133, %135, %cst_80 {dimension_numbers = #tpu.dot_dimension_numbers<[1], [0], [0], [1], [0, 0, 1, 1], [], []>} : vector<8x32xbf16>, vector<32x64xbf16>, vector<8x64xf32> -> vector<8x64xf32>
    %cst_81 = arith.constant 0.000000e+00 : f32
    %137 = vector.broadcast %cst_81 : f32 to vector<8x64xf32>
    %138 = arith.maximumf %136, %137 : vector<8x64xf32>
    %139 = arith.truncf %138 : vector<8x64xf32> to vector<8x64xbf16>
    %c0_82 = arith.constant 0 : index
    %c0_83 = arith.constant 0 : index
    %c0_84 = arith.constant 0 : index
    %140 = vector.load %arg9[%c0_82, %c0_83, %c0_84] : memref<1x64x32xbf16, #tpu.memory_space<vmem>>, vector<1x64x32xbf16>
    %141 = vector.shape_cast %140 : vector<1x64x32xbf16> to vector<64x32xbf16>
    %cst_85 = arith.constant dense<0.000000e+00> : vector<8x32xf32>
    %142 = tpu.matmul %139, %141, %cst_85 {dimension_numbers = #tpu.dot_dimension_numbers<[1], [0], [0], [1], [0, 0, 1, 1], [], []>} : vector<8x64xbf16>, vector<64x32xbf16>, vector<8x32xf32> -> vector<8x32xf32>
    %143 = arith.addf %142, %132 : vector<8x32xf32>
    %cst_86 = arith.constant dense<0.000000e+00> : vector<8xf32>
    %144 = vector.multi_reduction <add>, %143, %cst_86 [1] : vector<8x32xf32> to vector<8xf32>
    %145 = vector.shape_cast %144 : vector<8xf32> to vector<8x1xf32>
    %cst_87 = arith.constant 3.200000e+01 : f32
    %146 = vector.broadcast %cst_87 : f32 to vector<8x1xf32>
    %147 = arith.divf %145, %146 : vector<8x1xf32>
    %148 = vector.broadcast %147 : vector<8x1xf32> to vector<8x32xf32>
    %149 = arith.subf %143, %148 : vector<8x32xf32>
    %150 = arith.mulf %149, %149 : vector<8x32xf32>
    %cst_88 = arith.constant dense<0.000000e+00> : vector<8xf32>
    %151 = vector.multi_reduction <add>, %150, %cst_88 [1] : vector<8x32xf32> to vector<8xf32>
    %152 = vector.shape_cast %151 : vector<8xf32> to vector<8x1xf32>
    %cst_89 = arith.constant 3.200000e+01 : f32
    %153 = vector.broadcast %cst_89 : f32 to vector<8x1xf32>
    %154 = arith.divf %152, %153 : vector<8x1xf32>
    %155 = vector.broadcast %147 : vector<8x1xf32> to vector<8x32xf32>
    %156 = arith.subf %143, %155 : vector<8x32xf32>
    %cst_90 = arith.constant 9.99999974E-6 : f32
    %157 = vector.broadcast %cst_90 : f32 to vector<8x1xf32>
    %158 = arith.addf %154, %157 : vector<8x1xf32>
    %159 = math.rsqrt %158 : vector<8x1xf32>
    %160 = vector.broadcast %159 : vector<8x1xf32> to vector<8x32xf32>
    %161 = arith.mulf %156, %160 : vector<8x32xf32>
    %c0_91 = arith.constant 0 : index
    %c0_92 = arith.constant 0 : index
    %c0_93 = arith.constant 0 : index
    %162 = vector.load %arg10[%c0_91, %c0_92, %c0_93] : memref<1x1x32xf32, #tpu.memory_space<vmem>>, vector<1x1x32xf32>
    %163 = vector.shape_cast %162 : vector<1x1x32xf32> to vector<1x32xf32>
    %164 = vector.broadcast %163 : vector<1x32xf32> to vector<8x32xf32>
    %165 = arith.mulf %161, %164 : vector<8x32xf32>
    %c0_94 = arith.constant 0 : index
    %c0_95 = arith.constant 0 : index
    %c0_96 = arith.constant 0 : index
    %166 = vector.load %arg11[%c0_94, %c0_95, %c0_96] : memref<1x1x32xf32, #tpu.memory_space<vmem>>, vector<1x1x32xf32>
    %167 = vector.shape_cast %166 : vector<1x1x32xf32> to vector<1x32xf32>
    %168 = vector.broadcast %167 : vector<1x32xf32> to vector<8x32xf32>
    %169 = arith.addf %165, %168 : vector<8x32xf32>
    %170 = vector.shape_cast %169 : vector<8x32xf32> to vector<1x8x32xf32>
    %c0_97 = arith.constant 0 : index
    %c0_98 = arith.constant 0 : index
    %c0_99 = arith.constant 0 : index
    %171 = vector.load %arg14[%c0_97, %c0_98, %c0_99] : memref<1x8x32xf32, #tpu.memory_space<vmem>>, vector<1x8x32xf32>
    tpu.vector_store %arg14[%c0_97, %c0_98, %c0_99], %170 {strides = array<i32>} : memref<1x8x32xf32, #tpu.memory_space<vmem>>, vector<1x8x32xf32>,
    %c1_i32 = arith.constant 1 : i32
    %172 = arith.cmpi eq, %arg1, %c1_i32 : i32
    %173 = arith.extui %172 : i1 to i32
    %c0_i32_100 = arith.constant 0 : i32
    %174 = arith.cmpi ne, %173, %c0_i32_100 : i32
    scf.if %174 {
      %c0_101 = arith.constant 0 : index
      %c0_102 = arith.constant 0 : index
      %c0_103 = arith.constant 0 : index
      %175 = vector.load %arg12[%c0_101, %c0_102, %c0_103] : memref<1x8x32xf32, #tpu.memory_space<vmem>>, vector<1x8x32xf32>
      tpu.vector_store %arg12[%c0_101, %c0_102, %c0_103], %170 {strides = array<i32>} : memref<1x8x32xf32, #tpu.memory_space<vmem>>, vector<1x8x32xf32>,
    } else {
    }
    return
  }
  func.func @transform_0(%arg0: i32, %arg1: i32) -> (i32, i32, i32) {
    %c0_i32 = arith.constant 0 : i32
    %c0_i32_0 = arith.constant 0 : i32
    %c0_i32_1 = arith.constant 0 : i32
    return %arg0, %c0_i32, %c0_i32_0 : i32, i32, i32
  }
  func.func @transform_1(%arg0: i32, %arg1: i32) -> (i32, i32, i32) {
    %c0_i32 = arith.constant 0 : i32
    %c0_i32_0 = arith.constant 0 : i32
    %c0_i32_1 = arith.constant 0 : i32
    return %arg0, %c0_i32, %c0_i32_0 : i32, i32, i32
  }
  func.func @transform_2(%arg0: i32, %arg1: i32) -> (i32, i32, i32) {
    %c0_i32 = arith.constant 0 : i32
    %c0_i32_0 = arith.constant 0 : i32
    %c0_i32_1 = arith.constant 0 : i32
    return %arg1, %c0_i32, %c0_i32_0 : i32, i32, i32
  }
  func.func @transform_3(%arg0: i32, %arg1: i32) -> (i32, i32, i32) {
    %c0_i32 = arith.constant 0 : i32
    %c0_i32_0 = arith.constant 0 : i32
    %c0_i32_1 = arith.constant 0 : i32
    return %arg1, %c0_i32, %c0_i32_0 : i32, i32, i32
  }
  func.func @transform_4(%arg0: i32, %arg1: i32) -> (i32, i32, i32) {
    %c0_i32 = arith.constant 0 : i32
    %c0_i32_0 = arith.constant 0 : i32
    %c0_i32_1 = arith.constant 0 : i32
    return %arg1, %c0_i32, %c0_i32_0 : i32, i32, i32
  }
  func.func @transform_5(%arg0: i32, %arg1: i32) -> (i32, i32, i32) {
    %c0_i32 = arith.constant 0 : i32
    %c0_i32_0 = arith.constant 0 : i32
    %c0_i32_1 = arith.constant 0 : i32
    return %arg1, %c0_i32, %c0_i32_0 : i32, i32, i32
  }
  func.func @transform_6(%arg0: i32, %arg1: i32) -> (i32, i32, i32) {
    %c0_i32 = arith.constant 0 : i32
    %c0_i32_0 = arith.constant 0 : i32
    %c0_i32_1 = arith.constant 0 : i32
    return %arg1, %c0_i32, %c0_i32_0 : i32, i32, i32
  }
  func.func @transform_7(%arg0: i32, %arg1: i32) -> (i32, i32, i32) {
    %c0_i32 = arith.constant 0 : i32
    %c0_i32_0 = arith.constant 0 : i32
    %c0_i32_1 = arith.constant 0 : i32
    return %arg1, %c0_i32, %c0_i32_0 : i32, i32, i32
  }
  func.func @transform_8(%arg0: i32, %arg1: i32) -> (i32, i32, i32) {
    %c0_i32 = arith.constant 0 : i32
    %c0_i32_0 = arith.constant 0 : i32
    %c0_i32_1 = arith.constant 0 : i32
    return %arg1, %c0_i32, %c0_i32_0 : i32, i32, i32
  }
  func.func @transform_9(%arg0: i32, %arg1: i32) -> (i32, i32, i32) {
    %c0_i32 = arith.constant 0 : i32
    %c0_i32_0 = arith.constant 0 : i32
    %c0_i32_1 = arith.constant 0 : i32
    return %arg1, %c0_i32, %c0_i32_0 : i32, i32, i32
  }
  func.func @transform_10(%arg0: i32, %arg1: i32) -> (i32, i32, i32) {
    %c0_i32 = arith.constant 0 : i32
    %c0_i32_0 = arith.constant 0 : i32
    %c0_i32_1 = arith.constant 0 : i32
    return %arg0, %c0_i32, %c0_i32_0 : i32, i32, i32
  }
  func.func @transform_11(%arg0: i32, %arg1: i32) -> (i32, i32, i32, i32, i32) {
    %c0_i32 = arith.constant 0 : i32
    %c0_i32_0 = arith.constant 0 : i32
    %c0_i32_1 = arith.constant 0 : i32
    %c0_i32_2 = arith.constant 0 : i32
    return %arg1, %c0_i32, %arg0, %c0_i32_0, %c0_i32_1 : i32, i32, i32, i32, i32
  }
}

</mosaic_0001>

<llo_original>
// kernel: tpu_custom_call.1
$region0: #{tpu_custom_call.1}
  #allocation0 [shape = 'u32[]', space=smem, size = 0x4, offset = 0x4, fixed_abs, tag = 'smem constant byte address 0x4 - core index']
  #allocation1 [shape = 'u32[144,128]{1,0:T(1,128)}', space=vmem, size = 0x12000, scoped, tag = 'internal scratch']
  #allocation2 [shape = 'f32[1,8,32]{2,1,0:T(8,128)}', space=vmem, size = 0x1000, scoped, tag = 'scratch operand']
  #allocation3 [shape = 'bf16[12,8,8]{2,1,0:T(8,128)(2,1)}', space=vmem, size = 0x6000, scoped, tag = 'scratch operand']
  #allocation4 [shape = 'bf16[8,32]{1,0:T(8,128)(2,1)}', space=vmem, size = 0x800, scoped, tag = 'scratch operand']
  %s0 = inlined_call_operand.hbm [shape: f32[2,8,32], index: 0, kind: input, shape index: {}]
  %s1 = inlined_call_operand.vmem [shape: f32[2,1,8], index: 1, kind: input, shape index: {}]
  %s2 = inlined_call_operand.vmem [shape: bf16[2,32,96], index: 2, kind: input, shape index: {}]
  %s3 = inlined_call_operand.vmem [shape: bf16[2,32,32], index: 3, kind: input, shape index: {}]
  %s4 = inlined_call_operand.vmem [shape: f32[2,1,32], index: 4, kind: input, shape index: {}]
  %s5 = inlined_call_operand.vmem [shape: f32[2,1,32], index: 5, kind: input, shape index: {}]
  %s6 = inlined_call_operand.vmem [shape: bf16[2,32,64], index: 6, kind: input, shape index: {}]
  %s7 = inlined_call_operand.vmem [shape: bf16[2,64,32], index: 7, kind: input, shape index: {}]
  %s8 = inlined_call_operand.vmem [shape: f32[2,1,32], index: 8, kind: input, shape index: {}]
  %s9 = inlined_call_operand.vmem [shape: f32[2,1,32], index: 9, kind: input, shape index: {}]
  %s10 = inlined_call_operand.hbm [shape: f32[2,8,32], index: 10, kind: output, shape index: {0}]
  %s11 = inlined_call_operand.hbm [shape: bf16[2,4,2,8,8], index: 11, kind: output, shape index: {1}]
  %12 = xla_tuple %s10, %s11
  %s13 = sld [smem:[#allocation0]]
  $region93: #{tpu_custom_call.1} parent=0
    _
  %s15 = ssub.s32 1, %s13
  %s16 = scalar_select 0, %s15, %s13
  $region1: #{tpu_custom_call.1} parent=0
    #allocation5 [shape = 'u8[8192]{0}', space=vmem, size = 0x2000, scoped, tag = 'input window, operand 0']
    #allocation6 [shape = 's32[2]{0}', space=sflag, size = 0x8, scoped, tag = 'scoped memory for tpu_custom_call.1']
    #allocation7 [shape = 's32[2]{0}', space=sflag, size = 0x8, scoped, tag = 'scoped memory for tpu_custom_call.1']
    #allocation8 [shape = 'u8[8192]{0}', space=vmem, size = 0x2000, scoped, tag = 'output window, operand 0']
    #allocation9 [shape = 'u8[16384]{0}', space=vmem, size = 0x4000, scoped, tag = 'output window, operand 1']
    #allocation10 [shape = 's32[2]{0}', space=sflag, size = 0x8, scoped, tag = 'scoped memory for tpu_custom_call.1']
    %17 = vsyncpa [#allocation6], 0
    %s18 = scalar_lea.sflag [#allocation6], 1
    %19 = vsyncpa %s18, 0
    %20 = vsyncpa [#allocation7], 0
    %s21 = scalar_lea.sflag [#allocation7], 1
    %22 = vsyncpa %s21, 0
    %23 = vsyncpa [#allocation10], 0
    %s24 = scalar_lea.sflag [#allocation10], 1
    %25 = vsyncpa %s24, 0
    loop: start=0, step=1, limit=6
    $region2: #{tpu_custom_call.1} parent=1 // loop_pre_header
      _
    $region3: #{tpu_custom_call.1} parent=1 // loop_header
      %s27 = sphi 0, %s31
      %p28 = scmp.ge.s32.totalorder %s27, 6
      %s34 = sphi 0, %s46
      %s35 = sphi 0, %s42
      %s36 = sphi 0, %s34
      %s37 = sphi 0, %s35
      %s38 = sphi 0, %s36
      %s39 = sphi 0, %s37
      %s49 = sphi 0, %s51
      %s52 = sphi 0, %s49
      %s53 = sphi 0, %s52
      %s69 = sphi 0, %s53
      %s75 = sphi 0, %s77
      %s78 = sphi 0, %s75
      %s79 = sphi 0, %s78
      %s95 = sphi 0, %s79
      %s101 = sphi 0, %s103
      %s104 = sphi 0, %s101
      %s105 = sphi 0, %s104
      %s121 = sphi 0, %s105
      %s127 = sphi 0, %s129
      %s130 = sphi 0, %s127
      %s131 = sphi 0, %s130
      %s147 = sphi 0, %s131
      %s153 = sphi 0, %s155
      %s156 = sphi 0, %s153
      %s157 = sphi 0, %s156
      %s173 = sphi 0, %s157
      %s179 = sphi 0, %s181
      %s182 = sphi 0, %s179
      %s183 = sphi 0, %s182
      %s199 = sphi 0, %s183
      %s205 = sphi 0, %s207
      %s208 = sphi 0, %s205
      %s209 = sphi 0, %s208
      %s225 = sphi 0, %s209
      %s231 = sphi 0, %s233
      %s234 = sphi 0, %s231
      %s235 = sphi 0, %s234
      %s251 = sphi 0, %s235
      %s257 = sphi 0, %s259
      %s260 = sphi 0, %s257
      %s261 = sphi 0, %s260
      %s277 = sphi 0, %s261
      %s283 = sphi 0, %s285
      %s286 = sphi 0, %s283
      %s287 = sphi 0, %s286
      %s303 = sphi 0, %s287
      %s309 = sphi 0, %s311
      %s312 = sphi 0, %s309
      %s313 = sphi 0, %s312
      %s329 = sphi 0, %s313
      %s337 = sphi 0, %s339
      %s340 = sphi 0, %s337
      %s341 = sphi 0, %s340
      %s357 = sphi 0, %s341
    $region4: #{tpu_custom_call.1} parent=1 // loop_header_branch
      %30 = sbr.rel (%p28) target = $region8
    $region5: #{tpu_custom_call.1} parent=1 // loop_body
      %s32 = ssub.s32 %s27, 1
      %s33 = ssub.s32 %s27, 2
      %s40 = sadd.s32 1, %s35
      %p41 = scmp.ge.s32.totalorder %s40, 2
      %s42 = scalar_select %p41, 0, %s40
      %s43 = sadd.s32 1, %s34
      %s44 = scalar_select %p41, %s43, %s34
      %p45 = scmp.ge.s32.totalorder %s44, 2
      %s46 = scalar_select %p45, 0, %s44
      %s47 = ssub.s32 %s34, %s46
      %p48 = scmp.eq.s32.totalorder %s47, 0
      %s50 = sadd.s32 %s49, 1
      %s51 = scalar_select %p48, %s49, %s50
      %p54 = pneg %p48
      %p55 = scmp.eq.s32.totalorder %s27, 3
      %p56 = por %p54, %p55
      %p57 = scmp.ne.s32.totalorder %s49, %s52
      %p58 = scmp.eq.s32.totalorder %s27, 0
      %p59 = por %p57, %p58
      %p60 = scmp.ne.s32.totalorder %s49, %s52
      %p61 = scmp.eq.s32.totalorder %s32, 3
      %p62 = por %p60, %p61
      %p63 = scmp.ne.s32.totalorder %s52, %s53
      %p64 = scmp.eq.s32.totalorder %s32, 0
      %p65 = por %p63, %p64
      %p66 = scmp.ne.s32.totalorder %s52, %s53
      %p67 = scmp.eq.s32.totalorder %s33, 3
      %p68 = por %p66, %p67
      %p70 = scmp.ne.s32.totalorder %s53, %s69
      %p71 = scmp.eq.s32.totalorder %s33, 0
      %p72 = por %p70, %p71
      %s73 = ssub.s32 %s34, %s46
      %p74 = scmp.eq.s32.totalorder %s73, 0
      %s76 = sadd.s32 %s75, 1
      %s77 = scalar_select %p74, %s75, %s76
      %p80 = pneg %p74
      %p81 = scmp.eq.s32.totalorder %s27, 3
      %p82 = por %p80, %p81
      %p83 = scmp.ne.s32.totalorder %s75, %s78
      %p84 = scmp.eq.s32.totalorder %s27, 0
      %p85 = por %p83, %p84
      %p86 = scmp.ne.s32.totalorder %s75, %s78
      %p87 = scmp.eq.s32.totalorder %s32, 3
      %p88 = por %p86, %p87
      %p89 = scmp.ne.s32.totalorder %s78, %s79
      %p90 = scmp.eq.s32.totalorder %s32, 0
      %p91 = por %p89, %p90
      %p92 = scmp.ne.s32.totalorder %s78, %s79
      %p93 = scmp.eq.s32.totalorder %s33, 3
      %p94 = por %p92, %p93
      %p96 = scmp.ne.s32.totalorder %s79, %s95
      %p97 = scmp.eq.s32.totalorder %s33, 0
      %p98 = por %p96, %p97
      %s99 = ssub.s32 %s35, %s42
      %p100 = scmp.eq.s32.totalorder %s99, 0
      %s102 = sadd.s32 %s101, 1
      %s103 = scalar_select %p100, %s101, %s102
      %p106 = pneg %p100
      %p107 = scmp.eq.s32.totalorder %s27, 3
      %p108 = por %p106, %p107
      %p109 = scmp.ne.s32.totalorder %s101, %s104
      %p110 = scmp.eq.s32.totalorder %s27, 0
      %p111 = por %p109, %p110
      %p112 = scmp.ne.s32.totalorder %s101, %s104
      %p113 = scmp.eq.s32.totalorder %s32, 3
      %p114 = por %p112, %p113
      %p115 = scmp.ne.s32.totalorder %s104, %s105
      %p116 = scmp.eq.s32.totalorder %s32, 0
      %p117 = por %p115, %p116
      %p118 = scmp.ne.s32.totalorder %s104, %s105
      %p119 = scmp.eq.s32.totalorder %s33, 3
      %p120 = por %p118, %p119
      %p122 = scmp.ne.s32.totalorder %s105, %s121
      %p123 = scmp.eq.s32.totalorder %s33, 0
      %p124 = por %p122, %p123
      %s125 = ssub.s32 %s35, %s42
      %p126 = scmp.eq.s32.totalorder %s125, 0
      %s128 = sadd.s32 %s127, 1
      %s129 = scalar_select %p126, %s127, %s128
      %p132 = pneg %p126
      %p133 = scmp.eq.s32.totalorder %s27, 3
      %p134 = por %p132, %p133
      %p135 = scmp.ne.s32.totalorder %s127, %s130
      %p136 = scmp.eq.s32.totalorder %s27, 0
      %p137 = por %p135, %p136
      %p138 = scmp.ne.s32.totalorder %s127, %s130
      %p139 = scmp.eq.s32.totalorder %s32, 3
      %p140 = por %p138, %p139
      %p141 = scmp.ne.s32.totalorder %s130, %s131
      %p142 = scmp.eq.s32.totalorder %s32, 0
      %p143 = por %p141, %p142
      %p144 = scmp.ne.s32.totalorder %s130, %s131
      %p145 = scmp.eq.s32.totalorder %s33, 3
      %p146 = por %p144, %p145
      %p148 = scmp.ne.s32.totalorder %s131, %s147
      %p149 = scmp.eq.s32.totalorder %s33, 0
      %p150 = por %p148, %p149
      %s151 = ssub.s32 %s35, %s42
      %p152 = scmp.eq.s32.totalorder %s151, 0
      %s154 = sadd.s32 %s153, 1
      %s155 = scalar_select %p152, %s153, %s154
      %p158 = pneg %p152
      %p159 = scmp.eq.s32.totalorder %s27, 3
      %p160 = por %p158, %p159
      %p161 = scmp.ne.s32.totalorder %s153, %s156
      %p162 = scmp.eq.s32.totalorder %s27, 0
      %p163 = por %p161, %p162
      %p164 = scmp.ne.s32.totalorder %s153, %s156
      %p165 = scmp.eq.s32.totalorder %s32, 3
      %p166 = por %p164, %p165
      %p167 = scmp.ne.s32.totalorder %s156, %s157
      %p168 = scmp.eq.s32.totalorder %s32, 0
      %p169 = por %p167, %p168
      %p170 = scmp.ne.s32.totalorder %s156, %s157
      %p171 = scmp.eq.s32.totalorder %s33, 3
      %p172 = por %p170, %p171
      %p174 = scmp.ne.s32.totalorder %s157, %s173
      %p175 = scmp.eq.s32.totalorder %s33, 0
      %p176 = por %p174, %p175
      %s177 = ssub.s32 %s35, %s42
      %p178 = scmp.eq.s32.totalorder %s177, 0
      %s180 = sadd.s32 %s179, 1
      %s181 = scalar_select %p178, %s179, %s180
      %p184 = pneg %p178
      %p185 = scmp.eq.s32.totalorder %s27, 3
      %p186 = por %p184, %p185
      %p187 = scmp.ne.s32.totalorder %s179, %s182
      %p188 = scmp.eq.s32.totalorder %s27, 0
      %p189 = por %p187, %p188
      %p190 = scmp.ne.s32.totalorder %s179, %s182
      %p191 = scmp.eq.s32.totalorder %s32, 3
      %p192 = por %p190, %p191
      %p193 = scmp.ne.s32.totalorder %s182, %s183
      %p194 = scmp.eq.s32.totalorder %s32, 0
      %p195 = por %p193, %p194
      %p196 = scmp.ne.s32.totalorder %s182, %s183
      %p197 = scmp.eq.s32.totalorder %s33, 3
      %p198 = por %p196, %p197
      %p200 = scmp.ne.s32.totalorder %s183, %s199
      %p201 = scmp.eq.s32.totalorder %s33, 0
      %p202 = por %p200, %p201
      %s203 = ssub.s32 %s35, %s42
      %p204 = scmp.eq.s32.totalorder %s203, 0
      %s206 = sadd.s32 %s205, 1
      %s207 = scalar_select %p204, %s205, %s206
      %p210 = pneg %p204
      %p211 = scmp.eq.s32.totalorder %s27, 3
      %p212 = por %p210, %p211
      %p213 = scmp.ne.s32.totalorder %s205, %s208
      %p214 = scmp.eq.s32.totalorder %s27, 0
      %p215 = por %p213, %p214
      %p216 = scmp.ne.s32.totalorder %s205, %s208
      %p217 = scmp.eq.s32.totalorder %s32, 3
      %p218 = por %p216, %p217
      %p219 = scmp.ne.s32.totalorder %s208, %s209
      %p220 = scmp.eq.s32.totalorder %s32, 0
      %p221 = por %p219, %p220
      %p222 = scmp.ne.s32.totalorder %s208, %s209
      %p223 = scmp.eq.s32.totalorder %s33, 3
      %p224 = por %p222, %p223
      %p226 = scmp.ne.s32.totalorder %s209, %s225
      %p227 = scmp.eq.s32.totalorder %s33, 0
      %p228 = por %p226, %p227
      %s229 = ssub.s32 %s35, %s42
      %p230 = scmp.eq.s32.totalorder %s229, 0
      %s232 = sadd.s32 %s231, 1
      %s233 = scalar_select %p230, %s231, %s232
      %p236 = pneg %p230
      %p237 = scmp.eq.s32.totalorder %s27, 3
      %p238 = por %p236, %p237
      %p239 = scmp.ne.s32.totalorder %s231, %s234
      %p240 = scmp.eq.s32.totalorder %s27, 0
      %p241 = por %p239, %p240
      %p242 = scmp.ne.s32.totalorder %s231, %s234
      %p243 = scmp.eq.s32.totalorder %s32, 3
      %p244 = por %p242, %p243
      %p245 = scmp.ne.s32.totalorder %s234, %s235
      %p246 = scmp.eq.s32.totalorder %s32, 0
      %p247 = por %p245, %p246
      %p248 = scmp.ne.s32.totalorder %s234, %s235
      %p249 = scmp.eq.s32.totalorder %s33, 3
      %p250 = por %p248, %p249
      %p252 = scmp.ne.s32.totalorder %s235, %s251
      %p253 = scmp.eq.s32.totalorder %s33, 0
      %p254 = por %p252, %p253
      %s255 = ssub.s32 %s35, %s42
      %p256 = scmp.eq.s32.totalorder %s255, 0
      %s258 = sadd.s32 %s257, 1
      %s259 = scalar_select %p256, %s257, %s258
      %p262 = pneg %p256
      %p263 = scmp.eq.s32.totalorder %s27, 3
      %p264 = por %p262, %p263
      %p265 = scmp.ne.s32.totalorder %s257, %s260
      %p266 = scmp.eq.s32.totalorder %s27, 0
      %p267 = por %p265, %p266
      %p268 = scmp.ne.s32.totalorder %s257, %s260
      %p269 = scmp.eq.s32.totalorder %s32, 3
      %p270 = por %p268, %p269
      %p271 = scmp.ne.s32.totalorder %s260, %s261
      %p272 = scmp.eq.s32.totalorder %s32, 0
      %p273 = por %p271, %p272
      %p274 = scmp.ne.s32.totalorder %s260, %s261
      %p275 = scmp.eq.s32.totalorder %s33, 3
      %p276 = por %p274, %p275
      %p278 = scmp.ne.s32.totalorder %s261, %s277
      %p279 = scmp.eq.s32.totalorder %s33, 0
      %p280 = por %p278, %p279
      %s281 = ssub.s32 %s35, %s42
      %p282 = scmp.eq.s32.totalorder %s281, 0
      %s284 = sadd.s32 %s283, 1
      %s285 = scalar_select %p282, %s283, %s284
      %p288 = pneg %p282
      %p289 = scmp.eq.s32.totalorder %s27, 3
      %p290 = por %p288, %p289
      %p291 = scmp.ne.s32.totalorder %s283, %s286
      %p292 = scmp.eq.s32.totalorder %s27, 0
      %p293 = por %p291, %p292
      %p294 = scmp.ne.s32.totalorder %s283, %s286
      %p295 = scmp.eq.s32.totalorder %s32, 3
      %p296 = por %p294, %p295
      %p297 = scmp.ne.s32.totalorder %s286, %s287
      %p298 = scmp.eq.s32.totalorder %s32, 0
      %p299 = por %p297, %p298
      %p300 = scmp.ne.s32.totalorder %s286, %s287
      %p301 = scmp.eq.s32.totalorder %s33, 3
      %p302 = por %p300, %p301
      %p304 = scmp.ne.s32.totalorder %s287, %s303
      %p305 = scmp.eq.s32.totalorder %s33, 0
      %p306 = por %p304, %p305
      %s307 = ssub.s32 %s34, %s46
      %p308 = scmp.eq.s32.totalorder %s307, 0
      %s310 = sadd.s32 %s309, 1
      %s311 = scalar_select %p308, %s309, %s310
      %p314 = pneg %p308
      %p315 = scmp.eq.s32.totalorder %s27, 3
      %p316 = por %p314, %p315
      %p317 = scmp.ne.s32.totalorder %s309, %s312
      %p318 = scmp.eq.s32.totalorder %s27, 0
      %p319 = por %p317, %p318
      %p320 = scmp.ne.s32.totalorder %s309, %s312
      %p321 = scmp.eq.s32.totalorder %s32, 3
      %p322 = por %p320, %p321
      %p323 = scmp.ne.s32.totalorder %s312, %s313
      %p324 = scmp.eq.s32.totalorder %s32, 0
      %p325 = por %p323, %p324
      %p326 = scmp.ne.s32.totalorder %s312, %s313
      %p327 = scmp.eq.s32.totalorder %s33, 3
      %p328 = por %p326, %p327
      %p330 = scmp.ne.s32.totalorder %s313, %s329
      %p331 = scmp.eq.s32.totalorder %s33, 0
      %p332 = por %p330, %p331
      %s333 = ssub.s32 %s35, %s42
      %s334 = ssub.s32 %s34, %s46
      %s335 = sor.u32 %s333, %s334
      %p336 = scmp.eq.s32.totalorder %s335, 0
      %s338 = sadd.s32 %s337, 1
      %s339 = scalar_select %p336, %s337, %s338
      %p342 = pneg %p336
      %p343 = scmp.eq.s32.totalorder %s27, 3
      %p344 = por %p342, %p343
      %p345 = scmp.ne.s32.totalorder %s337, %s340
      %p346 = scmp.eq.s32.totalorder %s27, 0
      %p347 = por %p345, %p346
      %p348 = scmp.ne.s32.totalorder %s337, %s340
      %p349 = scmp.eq.s32.totalorder %s32, 3
      %p350 = por %p348, %p349
      %p351 = scmp.ne.s32.totalorder %s340, %s341
      %p352 = scmp.eq.s32.totalorder %s32, 0
      %p353 = por %p351, %p352
      %p354 = scmp.ne.s32.totalorder %s340, %s341
      %p355 = scmp.eq.s32.totalorder %s33, 3
      %p356 = por %p354, %p355
      %p358 = scmp.ne.s32.totalorder %s341, %s357
      %p359 = scmp.eq.s32.totalorder %s33, 0
      %p360 = por %p358, %p359
      %p361 = scmp.le.s32.totalorder 1, %s27
      %p362 = scmp.lt.s32.totalorder %s27, 5
      %p363 = pnand %p361, %p362
      %p364 = pneg %p363
      // Predicated region
      $region9: #{tpu_custom_call.1} parent=5 // pred_check
        _
      $region10: #{tpu_custom_call.1} parent=5 // pred_check_branch
        %366 = sbr.rel (%p363) target = $region12
      $region11: #{tpu_custom_call.1} parent=5 // pred_region
        %s367 = ssub.s32 %s27, 1
      $region12: #{tpu_custom_call.1} parent=5 // pred_fallthru
        _
      %p368 = scmp.lt.s32.totalorder %s27, 4
      // Predicated region
      $region13: #{tpu_custom_call.1} parent=5 // pred_check
        %p369 = pneg %p368
      $region14: #{tpu_custom_call.1} parent=5 // pred_check_branch
        %371 = sbr.rel (%p369) target = $region16
      $region15: #{tpu_custom_call.1} parent=5 // pred_region
        // Predicated region
        $region17: #{tpu_custom_call.1} parent=15 // pred_check
          %p372 = pneg %p59
        $region18: #{tpu_custom_call.1} parent=15 // pred_check_branch
          %374 = sbr.rel (%p372) target = $region20
        $region19: #{tpu_custom_call.1} parent=15 // pred_region
          %s375 = sand.u32 %s49, 1
          %s376 = scalar_lea.sflag [#allocation6], %s375
          %s377 = sand.u32 %s49, 1
          %s378 = smul.addr %s377, 8
          %s379 = scalar_lea.vmem [#allocation5], %s378
          %s381 = ssub.s32 128, 128
          %382 = vsyncadd %s376, %s381
          %s383 = smul.addr %s34, 128
          %s384 = scalar_lea.hbm %s0, %s383
          %s386 = sshll.u32 %s379, 4
          %s387 = int_to_ptr.vmem [resolvable:$true] %s386
          %389 = dma.hbm_to_vmem [thread:$0]  %s384, 128, %s387, %s376
        $region20: #{tpu_custom_call.1} parent=15 // pred_fallthru
          _
        // Predicated region
        $region21: #{tpu_custom_call.1} parent=15 // pred_check
          %p390 = pneg %p85
        $region22: #{tpu_custom_call.1} parent=15 // pred_check_branch
          %392 = sbr.rel (%p390) target = $region24
        $region23: #{tpu_custom_call.1} parent=15 // pred_region
          %p393 = scmp.lt.s32.totalorder %s34, 1
          %s394 = scalar_select %p393, %s34, 1
          %s395 = scalar_lea.vmem %s1, %s394
        $region24: #{tpu_custom_call.1} parent=15 // pred_fallthru
          _
        // Predicated region
        $region25: #{tpu_custom_call.1} parent=15 // pred_check
          %p396 = pneg %p111
        $region26: #{tpu_custom_call.1} parent=15 // pred_check_branch
          %398 = sbr.rel (%p396) target = $region28
        $region27: #{tpu_custom_call.1} parent=15 // pred_region
          %p399 = scmp.lt.s32.totalorder %s35, 1
          %s400 = scalar_select %p399, %s35, 1
          %s401 = smul.addr %s400, 4
          %s402 = smul.addr %s401, 4
          %s403 = scalar_lea.vmem %s2, %s402
        $region28: #{tpu_custom_call.1} parent=15 // pred_fallthru
          _
        // Predicated region
        $region29: #{tpu_custom_call.1} parent=15 // pred_check
          %p404 = pneg %p137
        $region30: #{tpu_custom_call.1} parent=15 // pred_check_branch
          %406 = sbr.rel (%p404) target = $region32
        $region31: #{tpu_custom_call.1} parent=15 // pred_region
          %p407 = scmp.lt.s32.totalorder %s35, 1
          %s408 = scalar_select %p407, %s35, 1
          %s409 = smul.addr %s408, 4
          %s410 = smul.addr %s409, 4
          %s411 = scalar_lea.vmem %s3, %s410
        $region32: #{tpu_custom_call.1} parent=15 // pred_fallthru
          _
        // Predicated region
        $region33: #{tpu_custom_call.1} parent=15 // pred_check
          %p412 = pneg %p163
        $region34: #{tpu_custom_call.1} parent=15 // pred_check_branch
          %414 = sbr.rel (%p412) target = $region36
        $region35: #{tpu_custom_call.1} parent=15 // pred_region
          %p415 = scmp.lt.s32.totalorder %s35, 1
          %s416 = scalar_select %p415, %s35, 1
          %s417 = scalar_lea.vmem %s4, %s416
        $region36: #{tpu_custom_call.1} parent=15 // pred_fallthru
          _
        // Predicated region
        $region37: #{tpu_custom_call.1} parent=15 // pred_check
          %p418 = pneg %p189
        $region38: #{tpu_custom_call.1} parent=15 // pred_check_branch
          %420 = sbr.rel (%p418) target = $region40
        $region39: #{tpu_custom_call.1} parent=15 // pred_region
          %p421 = scmp.lt.s32.totalorder %s35, 1
          %s422 = scalar_select %p421, %s35, 1
          %s423 = scalar_lea.vmem %s5, %s422
        $region40: #{tpu_custom_call.1} parent=15 // pred_fallthru
          _
        // Predicated region
        $region41: #{tpu_custom_call.1} parent=15 // pred_check
          %p424 = pneg %p215
        $region42: #{tpu_custom_call.1} parent=15 // pred_check_branch
          %426 = sbr.rel (%p424) target = $region44
        $region43: #{tpu_custom_call.1} parent=15 // pred_region
          %p427 = scmp.lt.s32.totalorder %s35, 1
          %s428 = scalar_select %p427, %s35, 1
          %s429 = smul.addr %s428, 4
          %s430 = smul.addr %s429, 4
          %s431 = scalar_lea.vmem %s6, %s430
        $region44: #{tpu_custom_call.1} parent=15 // pred_fallthru
          _
        // Predicated region
        $region45: #{tpu_custom_call.1} parent=15 // pred_check
          %p432 = pneg %p241
        $region46: #{tpu_custom_call.1} parent=15 // pred_check_branch
          %434 = sbr.rel (%p432) target = $region48
        $region47: #{tpu_custom_call.1} parent=15 // pred_region
          %p435 = scmp.lt.s32.totalorder %s35, 1
          %s436 = scalar_select %p435, %s35, 1
          %s437 = smul.addr %s436, 8
          %s438 = smul.addr %s437, 4
          %s439 = scalar_lea.vmem %s7, %s438
        $region48: #{tpu_custom_call.1} parent=15 // pred_fallthru
          _
        // Predicated region
        $region49: #{tpu_custom_call.1} parent=15 // pred_check
          %p440 = pneg %p267
        $region50: #{tpu_custom_call.1} parent=15 // pred_check_branch
          %442 = sbr.rel (%p440) target = $region52
        $region51: #{tpu_custom_call.1} parent=15 // pred_region
          %p443 = scmp.lt.s32.totalorder %s35, 1
          %s444 = scalar_select %p443, %s35, 1
          %s445 = scalar_lea.vmem %s8, %s444
        $region52: #{tpu_custom_call.1} parent=15 // pred_fallthru
          _
        // Predicated region
        $region53: #{tpu_custom_call.1} parent=15 // pred_check
          %p446 = pneg %p293
        $region54: #{tpu_custom_call.1} parent=15 // pred_check_branch
          %448 = sbr.rel (%p446) target = $region56
        $region55: #{tpu_custom_call.1} parent=15 // pred_region
          %p449 = scmp.lt.s32.totalorder %s35, 1
          %s450 = scalar_select %p449, %s35, 1
          %s451 = scalar_lea.vmem %s9, %s450
        $region56: #{tpu_custom_call.1} parent=15 // pred_fallthru
          _
      $region16: #{tpu_custom_call.1} parent=5 // pred_fallthru
        _
      %p452 = scmp.le.s32.totalorder 1, %s27
      %p453 = scmp.lt.s32.totalorder %s27, 5
      %p454 = pnand %p452, %p453
      %p455 = pneg %p454
      // Predicated region
      $region57: #{tpu_custom_call.1} parent=5 // pred_check
        _
      $region58: #{tpu_custom_call.1} parent=5 // pred_check_branch
        %457 = sbr.rel (%p454) target = $region60
      $region59: #{tpu_custom_call.1} parent=5 // pred_region
        %s458 = ssub.s32 %s27, 1
        %s459 = sand.u32 %s52, 1
        %s460 = scalar_lea.sflag [#allocation6], %s459
        %s461 = sand.u32 %s52, 1
        %s462 = smul.addr %s461, 8
        %s463 = scalar_lea.vmem [#allocation5], %s462
        // Predicated region
        $region61: #{tpu_custom_call.1} parent=59 // pred_check
          %p464 = pneg %p65
        $region62: #{tpu_custom_call.1} parent=59 // pred_check_branch
          %466 = sbr.rel (%p464) target = $region64
        $region63: #{tpu_custom_call.1} parent=59 // pred_region
          %467 = dma.done %s460, 128
        $region64: #{tpu_custom_call.1} parent=59 // pred_fallthru
          _
        %s468 = sand.u32 %s52, 1
        %s469 = scalar_lea.sflag [#allocation6], %s468
        %s470 = sand.u32 %s52, 1
        %s471 = smul.addr %s470, 8
        %s472 = scalar_lea.vmem [#allocation5], %s471
        %p473 = pneg %p65
        %p474 = pneg %p62
        %p475 = scmp.lt.s32.totalorder %s36, 1
        %s476 = scalar_select %p475, %s36, 1
        %s477 = scalar_lea.vmem %s1, %s476
        %p478 = pneg %p91
        %p479 = pneg %p88
        %p480 = scmp.lt.s32.totalorder %s37, 1
        %s481 = scalar_select %p480, %s37, 1
        %s482 = smul.addr %s481, 4
        %s483 = smul.addr %s482, 4
        %s484 = scalar_lea.vmem %s2, %s483
        %p485 = pneg %p117
        %p486 = pneg %p114
        %p487 = scmp.lt.s32.totalorder %s37, 1
        %s488 = scalar_select %p487, %s37, 1
        %s489 = smul.addr %s488, 4
        %s490 = smul.addr %s489, 4
        %s491 = scalar_lea.vmem %s3, %s490
        %p492 = pneg %p143
        %p493 = pneg %p140
        %p494 = scmp.lt.s32.totalorder %s37, 1
        %s495 = scalar_select %p494, %s37, 1
        %s496 = scalar_lea.vmem %s4, %s495
        %p497 = pneg %p169
        %p498 = pneg %p166
        %p499 = scmp.lt.s32.totalorder %s37, 1
        %s500 = scalar_select %p499, %s37, 1
        %s501 = scalar_lea.vmem %s5, %s500
        %p502 = pneg %p195
        %p503 = pneg %p192
        %p504 = scmp.lt.s32.totalorder %s37, 1
        %s505 = scalar_select %p504, %s37, 1
        %s506 = smul.addr %s505, 4
        %s507 = smul.addr %s506, 4
        %s508 = scalar_lea.vmem %s6, %s507
        %p509 = pneg %p221
        %p510 = pneg %p218
        %p511 = scmp.lt.s32.totalorder %s37, 1
        %s512 = scalar_select %p511, %s37, 1
        %s513 = smul.addr %s512, 8
        %s514 = smul.addr %s513, 4
        %s515 = scalar_lea.vmem %s7, %s514
        %p516 = pneg %p247
        %p517 = pneg %p244
        %p518 = scmp.lt.s32.totalorder %s37, 1
        %s519 = scalar_select %p518, %s37, 1
        %s520 = scalar_lea.vmem %s8, %s519
        %p521 = pneg %p273
        %p522 = pneg %p270
        %p523 = scmp.lt.s32.totalorder %s37, 1
        %s524 = scalar_select %p523, %s37, 1
        %s525 = scalar_lea.vmem %s9, %s524
        %p526 = pneg %p299
        %p527 = pneg %p296
        %p528 = pneg %p325
        %p529 = pneg %p322
        %s530 = sand.u32 %s312, 1
        %s531 = scalar_lea.sflag [#allocation7], %s530
        %s532 = sand.u32 %s312, 1
        %s533 = smul.addr %s532, 8
        %s534 = scalar_lea.vmem [#allocation8], %s533
        %p535 = pneg %p353
        %p536 = pneg %p350
        %s537 = sand.u32 %s340, 1
        %s538 = scalar_lea.sflag [#allocation10], %s537
        %s539 = sand.u32 %s340, 1
        %s540 = smul.addr %s539, 16
        %s541 = scalar_lea.vmem [#allocation9], %s540
        %p542 = scmp.lt.s32.totalorder %s36, 1
        %s543 = scalar_select %p542, %s36, 1
        %s544 = scalar_lea.vmem %s1, %s543
        %p545 = scmp.lt.s32.totalorder %s37, 1
        %s546 = scalar_select %p545, %s37, 1
        %s547 = smul.addr %s546, 4
        %s548 = smul.addr %s547, 4
        %s549 = scalar_lea.vmem %s2, %s548
        %p550 = scmp.lt.s32.totalorder %s37, 1
        %s551 = scalar_select %p550, %s37, 1
        %s552 = smul.addr %s551, 4
        %s553 = smul.addr %s552, 4
        %s554 = scalar_lea.vmem %s3, %s553
        %p555 = scmp.lt.s32.totalorder %s37, 1
        %s556 = scalar_select %p555, %s37, 1
        %s557 = scalar_lea.vmem %s4, %s556
        %p558 = scmp.lt.s32.totalorder %s37, 1
        %s559 = scalar_select %p558, %s37, 1
        %s560 = scalar_lea.vmem %s5, %s559
        %p561 = scmp.lt.s32.totalorder %s37, 1
        %s562 = scalar_select %p561, %s37, 1
        %s563 = smul.addr %s562, 4
        %s564 = smul.addr %s563, 4
        %s565 = scalar_lea.vmem %s6, %s564
        %p566 = scmp.lt.s32.totalorder %s37, 1
        %s567 = scalar_select %p566, %s37, 1
        %s568 = smul.addr %s567, 8
        %s569 = smul.addr %s568, 4
        %s570 = scalar_lea.vmem %s7, %s569
        %p571 = scmp.lt.s32.totalorder %s37, 1
        %s572 = scalar_select %p571, %s37, 1
        %s573 = scalar_lea.vmem %s8, %s572
        %p574 = scmp.lt.s32.totalorder %s37, 1
        %s575 = scalar_select %p574, %s37, 1
        %s576 = scalar_lea.vmem %s9, %s575
        %p578 = scmp.eq.s32.totalorder %s37, 0
        // Predicated region
        $region65: #{tpu_custom_call.1} parent=59 // pred_check
          %p579 = pneg %p578
        $region66: #{tpu_custom_call.1} parent=59 // pred_check_branch
          %581 = sbr.rel (%p579) target = $region68
        $region67: #{tpu_custom_call.1} parent=59 // pred_region
          %v582 = vld [vmem:[%s463] sm:$0xff]
          %vm583 = vcmask 261120
          %584 = vst.msk [vmem:[#allocation2] sm:$0xff] %vm583, %v582
        $region68: #{tpu_custom_call.1} parent=59 // pred_fallthru
          _
        %v585 = vld [vmem:[#allocation2] sm:$0xff]
        %v586 = vpack.c.bf16 %v585, %v585
        %v587 = vld [vmem:[%s549] sm:$0xf]
        %v588 = vld [vmem:[%s549 + $0x4] sm:$0xf]
        %v589 = vld [vmem:[%s549 + $0x8] sm:$0xf]
        %v590 = vld [vmem:[%s549 + $0xc] sm:$0xf]
        %v595 = vunpack.c.l.b16 %v587
        %v596 = vunpack.c.l.b16 %v588
        %v597 = vunpack.c.l.b16 %v589
        %v598 = vunpack.c.l.b16 %v590
        %v599 = vpack.c.b16 %v596, %v595
        %v600 = vpack.c.b16 %v598, %v597
        %vm603 = vcmask 261120
        %v605 = vsel %vm603, %v586, 0
        %607 = vmatprep.subr.bf16.mxu0 0
        %608 = vmatpush1.bf16.msra.mxu0 %v599
        %609 = vmatprep.subr.bf16.mxu0 0
        %610 = vmatpush1.bf16.msra.mxu0 %v600
        %611 = vmatprep.subr.bf16.mxu0 0
        %612 = vmatpush1.bf16.msra.mxu0 0
        %613 = vmatprep.subr.bf16.mxu0 0
        %614 = vmatpush1.bf16.msra.mxu0 0
        %615 = vmatprep.subr.bf16.mxu0 0
        %616 = vmatpush1.bf16.msra.mxu0 0
        %617 = vmatprep.subr.bf16.mxu0 0
        %618 = vmatpush1.bf16.msra.mxu0 0
        %619 = vmatprep.subr.bf16.mxu0 0
        %620 = vmatpush1.bf16.msra.mxu0 0
        %621 = vmatprep.subr.bf16.mxu0 0
        %622 = vmatpush1.bf16.msra.mxu0 0
        %623 = vmatprep.subr.bf16.mxu0 0
        %624 = vmatpush1.bf16.msra.mxu0 0
        %625 = vmatprep.subr.bf16.mxu0 0
        %626 = vmatpush1.bf16.msra.mxu0 0
        %627 = vmatprep.subr.bf16.mxu0 0
        %628 = vmatpush1.bf16.msra.mxu0 0
        %629 = vmatprep.subr.bf16.mxu0 0
        %630 = vmatpush1.bf16.msra.mxu0 0
        %631 = vmatprep.subr.bf16.mxu0 0
        %632 = vmatpush1.bf16.msra.mxu0 0
        %633 = vmatprep.subr.bf16.mxu0 0
        %634 = vmatpush1.bf16.msra.mxu0 0
        %635 = vmatprep.subr.bf16.mxu0 0
        %636 = vmatpush1.bf16.msra.mxu0 0
        %637 = vmatprep.subr.bf16.mxu0 0
        %638 = vmatpush1.bf16.msra.mxu0 0
        %639 = vmatprep.mubr.bf16.mxu0 0
        %640 = vmatmul.mubr.bf16.gmra.mrb[0].mxu0 %v605
        %v641 = vpop.f32.mrb[0].mxu0
        %v642 = vadd.f32 0.0, %v641
        %v643 = vpop.f32.mrb[0].mxu0
        %v644 = vpop.f32.mrb[0].mxu0
        %v645 = vpop.f32.mrb[0].mxu0
        %646 = vdwg.mxu0
        %v647 = vpack.c.bf16 %v642, %v642
        %vm648 = vcmask 60416
        %649 = vst.msk [vmem:[#allocation3] sm:$0xf] %vm648, %v647
        %v651 = vunpack.c.l.b16 %v647
        %v652 = vpack.c.b16 %v651, %v651
        %653 = vrot.lane.b32.xlu0 %v652, 120
        %v654 = vpop.permute.xlu0 %653
        %s656 = scalar_lea.vmem [#allocation3], 4
        %657 = vst.msk [vmem:[%s656] sm:$0xf] %vm648, %v654
        %658 = vrot.lane.b32.xlu0 %v652, 112
        %v659 = vpop.permute.xlu0 %658
        %s661 = scalar_lea.vmem [#allocation3], 8
        %662 = vst.msk [vmem:[%s661] sm:$0xf] %vm648, %v659
        %663 = vrot.lane.b32.xlu0 %v652, 104
        %v664 = vpop.permute.xlu0 %663
        %s666 = scalar_lea.vmem [#allocation3], 12
        %667 = vst.msk [vmem:[%s666] sm:$0xf] %vm648, %v664
        %668 = vrot.lane.b32.xlu0 %v652, 96
        %v669 = vpop.permute.xlu0 %668
        %s671 = scalar_lea.vmem [#allocation3], 16
        %672 = vst.msk [vmem:[%s671] sm:$0xf] %vm648, %v669
        %673 = vrot.lane.b32.xlu0 %v652, 88
        %v674 = vpop.permute.xlu0 %673
        %s676 = scalar_lea.vmem [#allocation3], 20
        %677 = vst.msk [vmem:[%s676] sm:$0xf] %vm648, %v674
        %678 = vrot.lane.b32.xlu0 %v652, 80
        %v679 = vpop.permute.xlu0 %678
        %s681 = scalar_lea.vmem [#allocation3], 24
        %682 = vst.msk [vmem:[%s681] sm:$0xf] %vm648, %v679
        %683 = vrot.lane.b32.xlu0 %v652, 72
        %v684 = vpop.permute.xlu0 %683
        %s686 = scalar_lea.vmem [#allocation3], 28
        %687 = vst.msk [vmem:[%s686] sm:$0xf] %vm648, %v684
        %688 = vrot.lane.b32.xlu0 %v652, 64
        %v689 = vpop.permute.xlu0 %688
        %s691 = scalar_lea.vmem [#allocation3], 32
        %692 = vst.msk [vmem:[%s691] sm:$0xf] %vm648, %v689
        %693 = vrot.lane.b32.xlu0 %v652, 56
        %v694 = vpop.permute.xlu0 %693
        %s696 = scalar_lea.vmem [#allocation3], 36
        %697 = vst.msk [vmem:[%s696] sm:$0xf] %vm648, %v694
        %698 = vrot.lane.b32.xlu0 %v652, 48
        %v699 = vpop.permute.xlu0 %698
        %s701 = scalar_lea.vmem [#allocation3], 40
        %702 = vst.msk [vmem:[%s701] sm:$0xf] %vm648, %v699
        %703 = vrot.lane.b32.xlu0 %v652, 40
        %v704 = vpop.permute.xlu0 %703
        %s706 = scalar_lea.vmem [#allocation3], 44
        %707 = vst.msk [vmem:[%s706] sm:$0xf] %vm648, %v704
        %v708 = vld [vmem:[#allocation3] sm:$0xf]
        %v709 = vld [vmem:[#allocation3 + $0x4] sm:$0xf]
        %v710 = vld [vmem:[#allocation3 + $0x8] sm:$0xf]
        %v711 = vld [vmem:[#allocation3 + $0xc] sm:$0xf]
        %v712 = vld [vmem:[%s671] sm:$0xf]
        %v713 = vld [vmem:[%s671 + $0x4] sm:$0xf]
        %v714 = vld [vmem:[%s671 + $0x8] sm:$0xf]
        %v715 = vld [vmem:[%s671 + $0xc] sm:$0xf]
        %v716 = vld [vmem:[%s691] sm:$0xf]
        %v717 = vld [vmem:[%s691 + $0x4] sm:$0xf]
        %v718 = vld [vmem:[%s691 + $0x8] sm:$0xf]
        %v719 = vld [vmem:[%s691 + $0xc] sm:$0xf]
        %vm720 = vcmask 64512
        %v722 = vsel %vm720, %v708, 0
        %v725 = vsel %vm720, %v712, 0
        %727 = vmatprep.subr.bf16.mxu0 0
        %728 = vmatpush1.bf16.xpose.msra.mxu0 %v725
        %729 = vmatprep.subr.bf16.mxu0 0
        %730 = vmatpush1.bf16.xpose.msra.mxu0 0
        %731 = vmatprep.subr.bf16.mxu0 0
        %732 = vmatpush1.bf16.xpose.msra.mxu0 0
        %733 = vmatprep.subr.bf16.mxu0 0
        %734 = vmatpush1.bf16.xpose.msra.mxu0 0
        %735 = vmatprep.subr.bf16.mxu0 0
        %736 = vmatpush1.bf16.xpose.msra.mxu0 0
        %737 = vmatprep.subr.bf16.mxu0 0
        %738 = vmatpush1.bf16.xpose.msra.mxu0 0
        %739 = vmatprep.subr.bf16.mxu0 0
        %740 = vmatpush1.bf16.xpose.msra.mxu0 0
        %741 = vmatprep.subr.bf16.mxu0 0
        %742 = vmatpush1.bf16.xpose.msra.mxu0 0
        %743 = vmatprep.subr.bf16.mxu0 0
        %744 = vmatpush1.bf16.xpose.msra.mxu0 0
        %745 = vmatprep.subr.bf16.mxu0 0
        %746 = vmatpush1.bf16.xpose.msra.mxu0 0
        %747 = vmatprep.subr.bf16.mxu0 0
        %748 = vmatpush1.bf16.xpose.msra.mxu0 0
        %749 = vmatprep.subr.bf16.mxu0 0
        %750 = vmatpush1.bf16.xpose.msra.mxu0 0
        %751 = vmatprep.subr.bf16.mxu0 0
        %752 = vmatpush1.bf16.xpose.msra.mxu0 0
        %753 = vmatprep.subr.bf16.mxu0 0
        %754 = vmatpush1.bf16.xpose.msra.mxu0 0
        %755 = vmatprep.subr.bf16.mxu0 0
        %756 = vmatpush1.bf16.xpose.msra.mxu0 0
        %757 = vmatprep.subr.bf16.mxu0 0
        %758 = vmatpush1.bf16.xpose.msra.mxu0 0
        %759 = vmatprep.mubr.bf16.mxu0 0
        %760 = vmatmul.mubr.bf16.gmra.mrb[0].mxu0 %v722
        %v761 = vpop.f32.mrb[0].mxu0
        %v762 = vadd.f32 0.0, %v761
        %v763 = vpop.f32.mrb[0].mxu0
        %v764 = vpop.f32.mrb[0].mxu0
        %v765 = vpop.f32.mrb[0].mxu0
        %766 = vdwg.mxu0
        %v768 = vsel %vm720, %v709, 0
        %v771 = vsel %vm720, %v713, 0
        %773 = vmatprep.subr.bf16.mxu0 0
        %774 = vmatpush1.bf16.xpose.msra.mxu0 %v771
        %775 = vmatprep.subr.bf16.mxu0 0
        %776 = vmatpush1.bf16.xpose.msra.mxu0 0
        %777 = vmatprep.subr.bf16.mxu0 0
        %778 = vmatpush1.bf16.xpose.msra.mxu0 0
        %779 = vmatprep.subr.bf16.mxu0 0
        %780 = vmatpush1.bf16.xpose.msra.mxu0 0
        %781 = vmatprep.subr.bf16.mxu0 0
        %782 = vmatpush1.bf16.xpose.msra.mxu0 0
        %783 = vmatprep.subr.bf16.mxu0 0
        %784 = vmatpush1.bf16.xpose.msra.mxu0 0
        %785 = vmatprep.subr.bf16.mxu0 0
        %786 = vmatpush1.bf16.xpose.msra.mxu0 0
        %787 = vmatprep.subr.bf16.mxu0 0
        %788 = vmatpush1.bf16.xpose.msra.mxu0 0
        %789 = vmatprep.subr.bf16.mxu0 0
        %790 = vmatpush1.bf16.xpose.msra.mxu0 0
        %791 = vmatprep.subr.bf16.mxu0 0
        %792 = vmatpush1.bf16.xpose.msra.mxu0 0
        %793 = vmatprep.subr.bf16.mxu0 0
        %794 = vmatpush1.bf16.xpose.msra.mxu0 0
        %795 = vmatprep.subr.bf16.mxu0 0
        %796 = vmatpush1.bf16.xpose.msra.mxu0 0
        %797 = vmatprep.subr.bf16.mxu0 0
        %798 = vmatpush1.bf16.xpose.msra.mxu0 0
        %799 = vmatprep.subr.bf16.mxu0 0
        %800 = vmatpush1.bf16.xpose.msra.mxu0 0
        %801 = vmatprep.subr.bf16.mxu0 0
        %802 = vmatpush1.bf16.xpose.msra.mxu0 0
        %803 = vmatprep.subr.bf16.mxu0 0
        %804 = vmatpush1.bf16.xpose.msra.mxu0 0
        %805 = vmatprep.mubr.bf16.mxu0 0
        %806 = vmatmul.mubr.bf16.gmra.mrb[0].mxu0 %v768
        %v807 = vpop.f32.mrb[0].mxu0
        %v808 = vadd.f32 0.0, %v807
        %v809 = vpop.f32.mrb[0].mxu0
        %v810 = vpop.f32.mrb[0].mxu0
        %v811 = vpop.f32.mrb[0].mxu0
        %812 = vdwg.mxu0
        %v814 = vsel %vm720, %v710, 0
        %v817 = vsel %vm720, %v714, 0
        %819 = vmatprep.subr.bf16.mxu0 0
        %820 = vmatpush1.bf16.xpose.msra.mxu0 %v817
        %821 = vmatprep.subr.bf16.mxu0 0
        %822 = vmatpush1.bf16.xpose.msra.mxu0 0
        %823 = vmatprep.subr.bf16.mxu0 0
        %824 = vmatpush1.bf16.xpose.msra.mxu0 0
        %825 = vmatprep.subr.bf16.mxu0 0
        %826 = vmatpush1.bf16.xpose.msra.mxu0 0
        %827 = vmatprep.subr.bf16.mxu0 0
        %828 = vmatpush1.bf16.xpose.msra.mxu0 0
        %829 = vmatprep.subr.bf16.mxu0 0
        %830 = vmatpush1.bf16.xpose.msra.mxu0 0
        %831 = vmatprep.subr.bf16.mxu0 0
        %832 = vmatpush1.bf16.xpose.msra.mxu0 0
        %833 = vmatprep.subr.bf16.mxu0 0
        %834 = vmatpush1.bf16.xpose.msra.mxu0 0
        %835 = vmatprep.subr.bf16.mxu0 0
        %836 = vmatpush1.bf16.xpose.msra.mxu0 0
        %837 = vmatprep.subr.bf16.mxu0 0
        %838 = vmatpush1.bf16.xpose.msra.mxu0 0
        %839 = vmatprep.subr.bf16.mxu0 0
        %840 = vmatpush1.bf16.xpose.msra.mxu0 0
        %841 = vmatprep.subr.bf16.mxu0 0
        %842 = vmatpush1.bf16.xpose.msra.mxu0 0
        %843 = vmatprep.subr.bf16.mxu0 0
        %844 = vmatpush1.bf16.xpose.msra.mxu0 0
        %845 = vmatprep.subr.bf16.mxu0 0
        %846 = vmatpush1.bf16.xpose.msra.mxu0 0
        %847 = vmatprep.subr.bf16.mxu0 0
        %848 = vmatpush1.bf16.xpose.msra.mxu0 0
        %849 = vmatprep.subr.bf16.mxu0 0
        %850 = vmatpush1.bf16.xpose.msra.mxu0 0
        %851 = vmatprep.mubr.bf16.mxu0 0
        %852 = vmatmul.mubr.bf16.gmra.mrb[0].mxu0 %v814
        %v853 = vpop.f32.mrb[0].mxu0
        %v854 = vadd.f32 0.0, %v853
        %v855 = vpop.f32.mrb[0].mxu0
        %v856 = vpop.f32.mrb[0].mxu0
        %v857 = vpop.f32.mrb[0].mxu0
        %858 = vdwg.mxu0
        %v860 = vsel %vm720, %v711, 0
        %v863 = vsel %vm720, %v715, 0
        %865 = vmatprep.subr.bf16.mxu0 0
        %866 = vmatpush1.bf16.xpose.msra.mxu0 %v863
        %867 = vmatprep.subr.bf16.mxu0 0
        %868 = vmatpush1.bf16.xpose.msra.mxu0 0
        %869 = vmatprep.subr.bf16.mxu0 0
        %870 = vmatpush1.bf16.xpose.msra.mxu0 0
        %871 = vmatprep.subr.bf16.mxu0 0
        %872 = vmatpush1.bf16.xpose.msra.mxu0 0
        %873 = vmatprep.subr.bf16.mxu0 0
        %874 = vmatpush1.bf16.xpose.msra.mxu0 0
        %875 = vmatprep.subr.bf16.mxu0 0
        %876 = vmatpush1.bf16.xpose.msra.mxu0 0
        %877 = vmatprep.subr.bf16.mxu0 0
        %878 = vmatpush1.bf16.xpose.msra.mxu0 0
        %879 = vmatprep.subr.bf16.mxu0 0
        %880 = vmatpush1.bf16.xpose.msra.mxu0 0
        %881 = vmatprep.subr.bf16.mxu0 0
        %882 = vmatpush1.bf16.xpose.msra.mxu0 0
        %883 = vmatprep.subr.bf16.mxu0 0
        %884 = vmatpush1.bf16.xpose.msra.mxu0 0
        %885 = vmatprep.subr.bf16.mxu0 0
        %886 = vmatpush1.bf16.xpose.msra.mxu0 0
        %887 = vmatprep.subr.bf16.mxu0 0
        %888 = vmatpush1.bf16.xpose.msra.mxu0 0
        %889 = vmatprep.subr.bf16.mxu0 0
        %890 = vmatpush1.bf16.xpose.msra.mxu0 0
        %891 = vmatprep.subr.bf16.mxu0 0
        %892 = vmatpush1.bf16.xpose.msra.mxu0 0
        %893 = vmatprep.subr.bf16.mxu0 0
        %894 = vmatpush1.bf16.xpose.msra.mxu0 0
        %895 = vmatprep.subr.bf16.mxu0 0
        %896 = vmatpush1.bf16.xpose.msra.mxu0 0
        %897 = vmatprep.mubr.bf16.mxu0 0
        %898 = vmatmul.mubr.bf16.gmra.mrb[0].mxu0 %v860
        %v899 = vpop.f32.mrb[0].mxu0
        %v900 = vadd.f32 0.0, %v899
        %v901 = vpop.f32.mrb[0].mxu0
        %v902 = vpop.f32.mrb[0].mxu0
        %v903 = vpop.f32.mrb[0].mxu0
        %904 = vdwg.mxu0
        %v905 = vld [vmem:[%s544] sm:$0x1]
        %v906 = vmul.f32 %v905, -1e+09
        %v908 = vlaneseq
        %v909 = vshrl.u32 %v908, 7
        %v910 = vsub.s32 0, %v909
        %v911 = vrot.slane %v906, %v910
        %v913 = vadd.f32 %v762, %v911
        %v914 = vadd.f32 %v808, %v911
        %v915 = vadd.f32 %v854, %v911
        %v916 = vadd.f32 %v900, %v911
        %v917 = vsel %vm720, %v913, -inf
        %918 = vmax.xlane.f32.xlu0 %v917
        %v919 = vpop.xlane.xlu0 %918
        %v920 = vsel %vm720, %v914, -inf
        %921 = vmax.xlane.f32.xlu0 %v920
        %v922 = vpop.xlane.xlu0 %921
        %v923 = vsel %vm720, %v915, -inf
        %924 = vmax.xlane.f32.xlu0 %v923
        %v925 = vpop.xlane.xlu0 %924
        %v926 = vsel %vm720, %v916, -inf
        %927 = vmax.xlane.f32.xlu0 %v926
        %v928 = vpop.xlane.xlu0 %927
        %v929 = vsub.f32 %v913, %v919
        %v930 = vsub.f32 %v914, %v922
        %v931 = vsub.f32 %v915, %v925
        %v932 = vsub.f32 %v916, %v928
        %v933 = vmul.f32 %v929, 1.442695
        %v934 = vpow.pop %v933
        %v935 = vmul.f32 %v930, 1.442695
        %v936 = vpow.pop %v935
        %v937 = vmul.f32 %v931, 1.442695
        %v938 = vpow.pop %v937
        %v939 = vmul.f32 %v932, 1.442695
        %v940 = vpow.pop %v939
        %v941 = vsel %vm720, %v934, 0.0
        %942 = vadd.xlane.f32.xlu0 %v941
        %v943 = vpop.xlane.xlu0 %942
        %v944 = vsel %vm720, %v936, 0.0
        %945 = vadd.xlane.f32.xlu0 %v944
        %v946 = vpop.xlane.xlu0 %945
        %v947 = vsel %vm720, %v938, 0.0
        %948 = vadd.xlane.f32.xlu0 %v947
        %v949 = vpop.xlane.xlu0 %948
        %v950 = vsel %vm720, %v940, 0.0
        %951 = vadd.xlane.f32.xlu0 %v950
        %v952 = vpop.xlane.xlu0 %951
        %v953 = vrcp.pop %v943
        %v954 = vmul.f32 1.0, %v953
        %v955 = vrcp.pop %v946
        %v956 = vmul.f32 1.0, %v955
        %v957 = vrcp.pop %v949
        %v958 = vmul.f32 1.0, %v957
        %v959 = vrcp.pop %v952
        %v960 = vmul.f32 1.0, %v959
        %v961 = vmul.f32 %v934, %v954
        %v962 = vmul.f32 %v936, %v956
        %v963 = vmul.f32 %v938, %v958
        %v964 = vmul.f32 %v940, %v960
        %v965 = vpack.c.bf16 %v961, %v961
        %v966 = vpack.c.bf16 %v962, %v962
        %v967 = vpack.c.bf16 %v963, %v963
        %v968 = vpack.c.bf16 %v964, %v964
        %969 = vst.msk [vmem:[%s541] sm:$0xf] %vm648, %v965
        %970 = vst.msk [vmem:[%s541 + $0x4] sm:$0xf] %vm648, %v966
        %971 = vst.msk [vmem:[%s541 + $0x8] sm:$0xf] %vm648, %v967
        %972 = vst.msk [vmem:[%s541 + $0xc] sm:$0xf] %vm648, %v968
        %v974 = vsel %vm720, %v965, 0
        %vm976 = vcmask 1043456
        %v978 = vsel %vm976, %v716, 0
        %980 = vmatprep.subr.bf16.mxu0 0
        %981 = vmatpush1.bf16.msra.mxu0 %v978
        %982 = vmatprep.subr.bf16.mxu0 0
        %983 = vmatpush1.bf16.msra.mxu0 0
        %984 = vmatprep.subr.bf16.mxu0 0
        %985 = vmatpush1.bf16.msra.mxu0 0
        %986 = vmatprep.subr.bf16.mxu0 0
        %987 = vmatpush1.bf16.msra.mxu0 0
        %988 = vmatprep.subr.bf16.mxu0 0
        %989 = vmatpush1.bf16.msra.mxu0 0
        %990 = vmatprep.subr.bf16.mxu0 0
        %991 = vmatpush1.bf16.msra.mxu0 0
        %992 = vmatprep.subr.bf16.mxu0 0
        %993 = vmatpush1.bf16.msra.mxu0 0
        %994 = vmatprep.subr.bf16.mxu0 0
        %995 = vmatpush1.bf16.msra.mxu0 0
        %996 = vmatprep.subr.bf16.mxu0 0
        %997 = vmatpush1.bf16.msra.mxu0 0
        %998 = vmatprep.subr.bf16.mxu0 0
        %999 = vmatpush1.bf16.msra.mxu0 0
        %1000 = vmatprep.subr.bf16.mxu0 0
        %1001 = vmatpush1.bf16.msra.mxu0 0
        %1002 = vmatprep.subr.bf16.mxu0 0
        %1003 = vmatpush1.bf16.msra.mxu0 0
        %1004 = vmatprep.subr.bf16.mxu0 0
        %1005 = vmatpush1.bf16.msra.mxu0 0
        %1006 = vmatprep.subr.bf16.mxu0 0
        %1007 = vmatpush1.bf16.msra.mxu0 0
        %1008 = vmatprep.subr.bf16.mxu0 0
        %1009 = vmatpush1.bf16.msra.mxu0 0
        %1010 = vmatprep.subr.bf16.mxu0 0
        %1011 = vmatpush1.bf16.msra.mxu0 0
        %1012 = vmatprep.mubr.bf16.mxu0 0
        %1013 = vmatmul.mubr.bf16.gmra.mrb[0].mxu0 %v974
        %v1014 = vpop.f32.mrb[0].mxu0
        %v1015 = vadd.f32 0.0, %v1014
        %v1016 = vpop.f32.mrb[0].mxu0
        %v1017 = vpop.f32.mrb[0].mxu0
        %v1018 = vpop.f32.mrb[0].mxu0
        %1019 = vdwg.mxu0
        %v1021 = vsel %vm720, %v966, 0
        %v1024 = vsel %vm976, %v717, 0
        %1026 = vmatprep.subr.bf16.mxu0 0
        %1027 = vmatpush1.bf16.msra.mxu0 %v1024
        %1028 = vmatprep.subr.bf16.mxu0 0
        %1029 = vmatpush1.bf16.msra.mxu0 0
        %1030 = vmatprep.subr.bf16.mxu0 0
        %1031 = vmatpush1.bf16.msra.mxu0 0
        %1032 = vmatprep.subr.bf16.mxu0 0
        %1033 = vmatpush1.bf16.msra.mxu0 0
        %1034 = vmatprep.subr.bf16.mxu0 0
        %1035 = vmatpush1.bf16.msra.mxu0 0
        %1036 = vmatprep.subr.bf16.mxu0 0
        %1037 = vmatpush1.bf16.msra.mxu0 0
        %1038 = vmatprep.subr.bf16.mxu0 0
        %1039 = vmatpush1.bf16.msra.mxu0 0
        %1040 = vmatprep.subr.bf16.mxu0 0
        %1041 = vmatpush1.bf16.msra.mxu0 0
        %1042 = vmatprep.subr.bf16.mxu0 0
        %1043 = vmatpush1.bf16.msra.mxu0 0
        %1044 = vmatprep.subr.bf16.mxu0 0
        %1045 = vmatpush1.bf16.msra.mxu0 0
        %1046 = vmatprep.subr.bf16.mxu0 0
        %1047 = vmatpush1.bf16.msra.mxu0 0
        %1048 = vmatprep.subr.bf16.mxu0 0
        %1049 = vmatpush1.bf16.msra.mxu0 0
        %1050 = vmatprep.subr.bf16.mxu0 0
        %1051 = vmatpush1.bf16.msra.mxu0 0
        %1052 = vmatprep.subr.bf16.mxu0 0
        %1053 = vmatpush1.bf16.msra.mxu0 0
        %1054 = vmatprep.subr.bf16.mxu0 0
        %1055 = vmatpush1.bf16.msra.mxu0 0
        %1056 = vmatprep.subr.bf16.mxu0 0
        %1057 = vmatpush1.bf16.msra.mxu0 0
        %1058 = vmatprep.mubr.bf16.mxu0 0
        %1059 = vmatmul.mubr.bf16.gmra.mrb[0].mxu0 %v1021
        %v1060 = vpop.f32.mrb[0].mxu0
        %v1061 = vadd.f32 0.0, %v1060
        %v1062 = vpop.f32.mrb[0].mxu0
        %v1063 = vpop.f32.mrb[0].mxu0
        %v1064 = vpop.f32.mrb[0].mxu0
        %1065 = vdwg.mxu0
        %v1067 = vsel %vm720, %v967, 0
        %v1070 = vsel %vm976, %v718, 0
        %1072 = vmatprep.subr.bf16.mxu0 0
        %1073 = vmatpush1.bf16.msra.mxu0 %v1070
        %1074 = vmatprep.subr.bf16.mxu0 0
        %1075 = vmatpush1.bf16.msra.mxu0 0
        %1076 = vmatprep.subr.bf16.mxu0 0
        %1077 = vmatpush1.bf16.msra.mxu0 0
        %1078 = vmatprep.subr.bf16.mxu0 0
        %1079 = vmatpush1.bf16.msra.mxu0 0
        %1080 = vmatprep.subr.bf16.mxu0 0
        %1081 = vmatpush1.bf16.msra.mxu0 0
        %1082 = vmatprep.subr.bf16.mxu0 0
        %1083 = vmatpush1.bf16.msra.mxu0 0
        %1084 = vmatprep.subr.bf16.mxu0 0
        %1085 = vmatpush1.bf16.msra.mxu0 0
        %1086 = vmatprep.subr.bf16.mxu0 0
        %1087 = vmatpush1.bf16.msra.mxu0 0
        %1088 = vmatprep.subr.bf16.mxu0 0
        %1089 = vmatpush1.bf16.msra.mxu0 0
        %1090 = vmatprep.subr.bf16.mxu0 0
        %1091 = vmatpush1.bf16.msra.mxu0 0
        %1092 = vmatprep.subr.bf16.mxu0 0
        %1093 = vmatpush1.bf16.msra.mxu0 0
        %1094 = vmatprep.subr.bf16.mxu0 0
        %1095 = vmatpush1.bf16.msra.mxu0 0
        %1096 = vmatprep.subr.bf16.mxu0 0
        %1097 = vmatpush1.bf16.msra.mxu0 0
        %1098 = vmatprep.subr.bf16.mxu0 0
        %1099 = vmatpush1.bf16.msra.mxu0 0
        %1100 = vmatprep.subr.bf16.mxu0 0
        %1101 = vmatpush1.bf16.msra.mxu0 0
        %1102 = vmatprep.subr.bf16.mxu0 0
        %1103 = vmatpush1.bf16.msra.mxu0 0
        %1104 = vmatprep.mubr.bf16.mxu0 0
        %1105 = vmatmul.mubr.bf16.gmra.mrb[0].mxu0 %v1067
        %v1106 = vpop.f32.mrb[0].mxu0
        %v1107 = vadd.f32 0.0, %v1106
        %v1108 = vpop.f32.mrb[0].mxu0
        %v1109 = vpop.f32.mrb[0].mxu0
        %v1110 = vpop.f32.mrb[0].mxu0
        %1111 = vdwg.mxu0
        %v1113 = vsel %vm720, %v968, 0
        %v1116 = vsel %vm976, %v719, 0
        %1118 = vmatprep.subr.bf16.mxu0 0
        %1119 = vmatpush1.bf16.msra.mxu0 %v1116
        %1120 = vmatprep.subr.bf16.mxu0 0
        %1121 = vmatpush1.bf16.msra.mxu0 0
        %1122 = vmatprep.subr.bf16.mxu0 0
        %1123 = vmatpush1.bf16.msra.mxu0 0
        %1124 = vmatprep.subr.bf16.mxu0 0
        %1125 = vmatpush1.bf16.msra.mxu0 0
        %1126 = vmatprep.subr.bf16.mxu0 0
        %1127 = vmatpush1.bf16.msra.mxu0 0
        %1128 = vmatprep.subr.bf16.mxu0 0
        %1129 = vmatpush1.bf16.msra.mxu0 0
        %1130 = vmatprep.subr.bf16.mxu0 0
        %1131 = vmatpush1.bf16.msra.mxu0 0
        %1132 = vmatprep.subr.bf16.mxu0 0
        %1133 = vmatpush1.bf16.msra.mxu0 0
        %1134 = vmatprep.subr.bf16.mxu0 0
        %1135 = vmatpush1.bf16.msra.mxu0 0
        %1136 = vmatprep.subr.bf16.mxu0 0
        %1137 = vmatpush1.bf16.msra.mxu0 0
        %1138 = vmatprep.subr.bf16.mxu0 0
        %1139 = vmatpush1.bf16.msra.mxu0 0
        %1140 = vmatprep.subr.bf16.mxu0 0
        %1141 = vmatpush1.bf16.msra.mxu0 0
        %1142 = vmatprep.subr.bf16.mxu0 0
        %1143 = vmatpush1.bf16.msra.mxu0 0
        %1144 = vmatprep.subr.bf16.mxu0 0
        %1145 = vmatpush1.bf16.msra.mxu0 0
        %1146 = vmatprep.subr.bf16.mxu0 0
        %1147 = vmatpush1.bf16.msra.mxu0 0
        %1148 = vmatprep.subr.bf16.mxu0 0
        %1149 = vmatpush1.bf16.msra.mxu0 0
        %1150 = vmatprep.mubr.bf16.mxu0 0
        %1151 = vmatmul.mubr.bf16.gmra.mrb[0].mxu0 %v1113
        %v1152 = vpop.f32.mrb[0].mxu0
        %v1153 = vadd.f32 0.0, %v1152
        %v1154 = vpop.f32.mrb[0].mxu0
        %v1155 = vpop.f32.mrb[0].mxu0
        %v1156 = vpop.f32.mrb[0].mxu0
        %1157 = vdwg.mxu0
        %v1158 = vpack.c.bf16 %v1015, %v1015
        %1159 = vst.msk [vmem:[#allocation4] sm:$0xf] %vm648, %v1158
        %v1160 = vpack.c.bf16 %v1061, %v1061
        %v1162 = vunpack.c.l.b16 %v1160
        %v1163 = vpack.c.b16 %v1162, %v1162
        %1164 = vrot.lane.b32.xlu0 %v1163, 8
        %v1165 = vpop.permute.xlu0 %1164
        %vm1167 = vcmask 126016
        %1168 = vst.msk [vmem:[#allocation4] sm:$0xf] %vm1167, %v1165
        %v1169 = vpack.c.bf16 %v1107, %v1107
        %v1171 = vunpack.c.l.b16 %v1169
        %v1172 = vpack.c.b16 %v1171, %v1171
        %1173 = vrot.lane.b32.xlu0 %v1172, 16
        %v1174 = vpop.permute.xlu0 %1173
        %vm1176 = vcmask 191616
        %1177 = vst.msk [vmem:[#allocation4] sm:$0xf] %vm1176, %v1174
        %v1178 = vpack.c.bf16 %v1153, %v1153
        %v1180 = vunpack.c.l.b16 %v1178
        %v1181 = vpack.c.b16 %v1180, %v1180
        %1182 = vrot.lane.b32.xlu0 %v1181, 24
        %v1183 = vpop.permute.xlu0 %1182
        %vm1185 = vcmask 257216
        %1186 = vst.msk [vmem:[#allocation4] sm:$0xf] %vm1185, %v1183
        %v1187 = vld [vmem:[#allocation4] sm:$0xf]
        %v1188 = vld [vmem:[%s554] sm:$0xf]
        %v1189 = vld [vmem:[%s554 + $0x4] sm:$0xf]
        %v1190 = vld [vmem:[%s554 + $0x8] sm:$0xf]
        %v1191 = vld [vmem:[%s554 + $0xc] sm:$0xf]
        %v1196 = vunpack.c.l.b16 %v1188
        %v1197 = vunpack.c.l.b16 %v1189
        %v1198 = vunpack.c.l.b16 %v1190
        %v1199 = vunpack.c.l.b16 %v1191
        %v1200 = vpack.c.b16 %v1197, %v1196
        %v1201 = vpack.c.b16 %v1199, %v1198
        %v1205 = vsel %vm603, %v1187, 0
        %1207 = vmatprep.subr.bf16.mxu0 0
        %1208 = vmatpush1.bf16.msra.mxu0 %v1200
        %1209 = vmatprep.subr.bf16.mxu0 0
        %1210 = vmatpush1.bf16.msra.mxu0 %v1201
        %1211 = vmatprep.subr.bf16.mxu0 0
        %1212 = vmatpush1.bf16.msra.mxu0 0
        %1213 = vmatprep.subr.bf16.mxu0 0
        %1214 = vmatpush1.bf16.msra.mxu0 0
        %1215 = vmatprep.subr.bf16.mxu0 0
        %1216 = vmatpush1.bf16.msra.mxu0 0
        %1217 = vmatprep.subr.bf16.mxu0 0
        %1218 = vmatpush1.bf16.msra.mxu0 0
        %1219 = vmatprep.subr.bf16.mxu0 0
        %1220 = vmatpush1.bf16.msra.mxu0 0
        %1221 = vmatprep.subr.bf16.mxu0 0
        %1222 = vmatpush1.bf16.msra.mxu0 0
        %1223 = vmatprep.subr.bf16.mxu0 0
        %1224 = vmatpush1.bf16.msra.mxu0 0
        %1225 = vmatprep.subr.bf16.mxu0 0
        %1226 = vmatpush1.bf16.msra.mxu0 0
        %1227 = vmatprep.subr.bf16.mxu0 0
        %1228 = vmatpush1.bf16.msra.mxu0 0
        %1229 = vmatprep.subr.bf16.mxu0 0
        %1230 = vmatpush1.bf16.msra.mxu0 0
        %1231 = vmatprep.subr.bf16.mxu0 0
        %1232 = vmatpush1.bf16.msra.mxu0 0
        %1233 = vmatprep.subr.bf16.mxu0 0
        %1234 = vmatpush1.bf16.msra.mxu0 0
        %1235 = vmatprep.subr.bf16.mxu0 0
        %1236 = vmatpush1.bf16.msra.mxu0 0
        %1237 = vmatprep.subr.bf16.mxu0 0
        %1238 = vmatpush1.bf16.msra.mxu0 0
        %1239 = vmatprep.mubr.bf16.mxu0 0
        %1240 = vmatmul.mubr.bf16.gmra.mrb[0].mxu0 %v1205
        %v1241 = vpop.f32.mrb[0].mxu0
        %v1242 = vadd.f32 %v585, %v1241
        %v1243 = vpop.f32.mrb[0].mxu0
        %v1244 = vpop.f32.mrb[0].mxu0
        %v1245 = vpop.f32.mrb[0].mxu0
        %1246 = vdwg.mxu0
        %v1247 = vsel %vm603, %v1242, 0.0
        %1248 = vadd.xlane.f32.xlu0 %v1247
        %v1249 = vpop.xlane.xlu0 %1248
        %v1250 = vrcp.pop 32.0
        %v1251 = vmul.f32 %v1249, %v1250
        %v1252 = vsub.f32 %v1242, %v1251
        %v1253 = vmul.f32 %v1252, %v1252
        %v1254 = vsel %vm603, %v1253, 0.0
        %1255 = vadd.xlane.f32.xlu0 %v1254
        %v1256 = vpop.xlane.xlu0 %1255
        %v1257 = vmul.f32 %v1256, %v1250
        %v1258 = vadd.f32 %v1257, 1e-05
        %v1259 = vrsqrt.pop %v1258
        %v1260 = vmul.f32 %v1252, %v1259
        %v1261 = vld [vmem:[%s557] sm:$0x1]
        %v1263 = vlaneseq
        %v1264 = vshrl.u32 %v1263, 7
        %v1265 = vsub.s32 0, %v1264
        %v1266 = vrot.slane %v1261, %v1265
        %v1268 = vmul.f32 %v1260, %v1266
        %v1269 = vld [vmem:[%s560] sm:$0x1]
        %v1271 = vlaneseq
        %v1272 = vshrl.u32 %v1271, 7
        %v1273 = vsub.s32 0, %v1272
        %v1274 = vrot.slane %v1269, %v1273
        %v1276 = vadd.f32 %v1268, %v1274
        %v1277 = vpack.c.bf16 %v1276, %v1276
        %v1278 = vld [vmem:[%s565] sm:$0xf]
        %v1279 = vld [vmem:[%s565 + $0x4] sm:$0xf]
        %v1280 = vld [vmem:[%s565 + $0x8] sm:$0xf]
        %v1281 = vld [vmem:[%s565 + $0xc] sm:$0xf]
        %v1286 = vunpack.c.l.b16 %v1278
        %v1287 = vunpack.c.l.b16 %v1279
        %v1288 = vunpack.c.l.b16 %v1280
        %v1289 = vunpack.c.l.b16 %v1281
        %v1290 = vpack.c.b16 %v1287, %v1286
        %v1291 = vpack.c.b16 %v1289, %v1288
        %v1295 = vsel %vm603, %v1277, 0
        %1297 = vmatprep.subr.bf16.mxu0 0
        %1298 = vmatpush1.bf16.msra.mxu0 %v1290
        %1299 = vmatprep.subr.bf16.mxu0 0
        %1300 = vmatpush1.bf16.msra.mxu0 %v1291
        %1301 = vmatprep.subr.bf16.mxu0 0
        %1302 = vmatpush1.bf16.msra.mxu0 0
        %1303 = vmatprep.subr.bf16.mxu0 0
        %1304 = vmatpush1.bf16.msra.mxu0 0
        %1305 = vmatprep.subr.bf16.mxu0 0
        %1306 = vmatpush1.bf16.msra.mxu0 0
        %1307 = vmatprep.subr.bf16.mxu0 0
        %1308 = vmatpush1.bf16.msra.mxu0 0
        %1309 = vmatprep.subr.bf16.mxu0 0
        %1310 = vmatpush1.bf16.msra.mxu0 0
        %1311 = vmatprep.subr.bf16.mxu0 0
        %1312 = vmatpush1.bf16.msra.mxu0 0
        %1313 = vmatprep.subr.bf16.mxu0 0
        %1314 = vmatpush1.bf16.msra.mxu0 0
        %1315 = vmatprep.subr.bf16.mxu0 0
        %1316 = vmatpush1.bf16.msra.mxu0 0
        %1317 = vmatprep.subr.bf16.mxu0 0
        %1318 = vmatpush1.bf16.msra.mxu0 0
        %1319 = vmatprep.subr.bf16.mxu0 0
        %1320 = vmatpush1.bf16.msra.mxu0 0
        %1321 = vmatprep.subr.bf16.mxu0 0
        %1322 = vmatpush1.bf16.msra.mxu0 0
        %1323 = vmatprep.subr.bf16.mxu0 0
        %1324 = vmatpush1.bf16.msra.mxu0 0
        %1325 = vmatprep.subr.bf16.mxu0 0
        %1326 = vmatpush1.bf16.msra.mxu0 0
        %1327 = vmatprep.subr.bf16.mxu0 0
        %1328 = vmatpush1.bf16.msra.mxu0 0
        %1329 = vmatprep.mubr.bf16.mxu0 0
        %1330 = vmatmul.mubr.bf16.gmra.mrb[0].mxu0 %v1295
        %v1331 = vpop.f32.mrb[0].mxu0
        %v1332 = vadd.f32 0.0, %v1331
        %v1333 = vpop.f32.mrb[0].mxu0
        %v1334 = vpop.f32.mrb[0].mxu0
        %v1335 = vpop.f32.mrb[0].mxu0
        %1336 = vdwg.mxu0
        %v1337 = vmax.f32 %v1332, 0.0
        %v1338 = vpack.c.bf16 %v1337, %v1337
        %v1339 = vld [vmem:[%s570] sm:$0xf]
        %v1340 = vld [vmem:[%s570 + $0x4] sm:$0xf]
        %v1341 = vld [vmem:[%s570 + $0x8] sm:$0xf]
        %v1342 = vld [vmem:[%s570 + $0xc] sm:$0xf]
        %v1343 = vld [vmem:[%s570 + $0x10] sm:$0xf]
        %v1344 = vld [vmem:[%s570 + $0x14] sm:$0xf]
        %v1345 = vld [vmem:[%s570 + $0x18] sm:$0xf]
        %v1346 = vld [vmem:[%s570 + $0x1c] sm:$0xf]
        %v1355 = vunpack.c.l.b16 %v1339
        %v1356 = vunpack.c.l.b16 %v1340
        %v1357 = vunpack.c.l.b16 %v1341
        %v1358 = vunpack.c.l.b16 %v1342
        %v1359 = vunpack.c.l.b16 %v1343
        %v1360 = vunpack.c.l.b16 %v1344
        %v1361 = vunpack.c.l.b16 %v1345
        %v1362 = vunpack.c.l.b16 %v1346
        %v1363 = vpack.c.b16 %v1356, %v1355
        %v1364 = vpack.c.b16 %v1358, %v1357
        %v1365 = vpack.c.b16 %v1360, %v1359
        %v1366 = vpack.c.b16 %v1362, %v1361
        %vm1371 = vcmask 523264
        %v1373 = vsel %vm1371, %v1338, 0
        %1375 = vmatprep.subr.bf16.mxu0 0
        %1376 = vmatpush1.bf16.msra.mxu0 %v1363
        %1377 = vmatprep.subr.bf16.mxu0 0
        %1378 = vmatpush1.bf16.msra.mxu0 %v1364
        %1379 = vmatprep.subr.bf16.mxu0 0
        %1380 = vmatpush1.bf16.msra.mxu0 %v1365
        %1381 = vmatprep.subr.bf16.mxu0 0
        %1382 = vmatpush1.bf16.msra.mxu0 %v1366
        %1383 = vmatprep.subr.bf16.mxu0 0
        %1384 = vmatpush1.bf16.msra.mxu0 0
        %1385 = vmatprep.subr.bf16.mxu0 0
        %1386 = vmatpush1.bf16.msra.mxu0 0
        %1387 = vmatprep.subr.bf16.mxu0 0
        %1388 = vmatpush1.bf16.msra.mxu0 0
        %1389 = vmatprep.subr.bf16.mxu0 0
        %1390 = vmatpush1.bf16.msra.mxu0 0
        %1391 = vmatprep.subr.bf16.mxu0 0
        %1392 = vmatpush1.bf16.msra.mxu0 0
        %1393 = vmatprep.subr.bf16.mxu0 0
        %1394 = vmatpush1.bf16.msra.mxu0 0
        %1395 = vmatprep.subr.bf16.mxu0 0
        %1396 = vmatpush1.bf16.msra.mxu0 0
        %1397 = vmatprep.subr.bf16.mxu0 0
        %1398 = vmatpush1.bf16.msra.mxu0 0
        %1399 = vmatprep.subr.bf16.mxu0 0
        %1400 = vmatpush1.bf16.msra.mxu0 0
        %1401 = vmatprep.subr.bf16.mxu0 0
        %1402 = vmatpush1.bf16.msra.mxu0 0
        %1403 = vmatprep.subr.bf16.mxu0 0
        %1404 = vmatpush1.bf16.msra.mxu0 0
        %1405 = vmatprep.subr.bf16.mxu0 0
        %1406 = vmatpush1.bf16.msra.mxu0 0
        %1407 = vmatprep.mubr.bf16.mxu0 0
        %1408 = vmatmul.mubr.bf16.gmra.mrb[0].mxu0 %v1373
        %v1409 = vpop.f32.mrb[0].mxu0
        %v1410 = vadd.f32 %v1276, %v1409
        %v1411 = vpop.f32.mrb[0].mxu0
        %v1412 = vpop.f32.mrb[0].mxu0
        %v1413 = vpop.f32.mrb[0].mxu0
        %1414 = vdwg.mxu0
        %v1415 = vsel %vm603, %v1410, 0.0
        %1416 = vadd.xlane.f32.xlu0 %v1415
        %v1417 = vpop.xlane.xlu0 %1416
        %v1418 = vmul.f32 %v1417, %v1250
        %v1419 = vsub.f32 %v1410, %v1418
        %v1420 = vmul.f32 %v1419, %v1419
        %v1421 = vsel %vm603, %v1420, 0.0
        %1422 = vadd.xlane.f32.xlu0 %v1421
        %v1423 = vpop.xlane.xlu0 %1422
        %v1424 = vmul.f32 %v1423, %v1250
        %v1425 = vadd.f32 %v1424, 1e-05
        %v1426 = vrsqrt.pop %v1425
        %v1427 = vmul.f32 %v1419, %v1426
        %v1428 = vld [vmem:[%s573] sm:$0x1]
        %v1430 = vlaneseq
        %v1431 = vshrl.u32 %v1430, 7
        %v1432 = vsub.s32 0, %v1431
        %v1433 = vrot.slane %v1428, %v1432
        %v1435 = vmul.f32 %v1427, %v1433
        %v1436 = vld [vmem:[%s576] sm:$0x1]
        %v1438 = vlaneseq
        %v1439 = vshrl.u32 %v1438, 7
        %v1440 = vsub.s32 0, %v1439
        %v1441 = vrot.slane %v1436, %v1440
        %v1443 = vadd.f32 %v1435, %v1441
        %1444 = vst.msk [vmem:[#allocation2] sm:$0xff] %vm603, %v1443
        %p1445 = scmp.eq.s32.totalorder %s37, 1
        // Predicated region
        $region69: #{tpu_custom_call.1} parent=59 // pred_check
          %p1446 = pneg %p1445
        $region70: #{tpu_custom_call.1} parent=59 // pred_check_branch
          %1448 = sbr.rel (%p1446) target = $region72
        $region71: #{tpu_custom_call.1} parent=59 // pred_region
          %1449 = vst.msk [vmem:[%s534] sm:$0xff] %vm603, %v1443
        $region72: #{tpu_custom_call.1} parent=59 // pred_fallthru
          _
        %s1450 = sand.u32 %s312, 1
        %s1451 = scalar_lea.sflag [#allocation7], %s1450
        %s1452 = sand.u32 %s312, 1
        %s1453 = smul.addr %s1452, 8
        %s1454 = scalar_lea.vmem [#allocation8], %s1453
        %s1455 = sand.u32 %s340, 1
        %s1456 = scalar_lea.sflag [#allocation10], %s1455
        %s1457 = sand.u32 %s340, 1
        %s1458 = smul.addr %s1457, 16
        %s1459 = scalar_lea.vmem [#allocation9], %s1458
        // Predicated region
        $region73: #{tpu_custom_call.1} parent=59 // pred_check
          %p1460 = pneg %p322
        $region74: #{tpu_custom_call.1} parent=59 // pred_check_branch
          %1462 = sbr.rel (%p1460) target = $region76
        $region75: #{tpu_custom_call.1} parent=59 // pred_region
          %s1464 = ssub.s32 128, 128
          %1465 = vsyncadd %s1451, %s1464
          %s1466 = smul.addr %s36, 128
          %s1467 = scalar_lea.hbm %s10, %s1466
          %s1469 = sshll.u32 %s1454, 4
          %s1470 = int_to_ptr.vmem [resolvable:$true] %s1469
          %1472 = dma.vmem_to_hbm [thread:$0]  %s1470, 128, %s1467, %s1451
        $region76: #{tpu_custom_call.1} parent=59 // pred_fallthru
          _
        // Predicated region
        $region77: #{tpu_custom_call.1} parent=59 // pred_check
          %p1473 = pneg %p350
        $region78: #{tpu_custom_call.1} parent=59 // pred_check_branch
          %1475 = sbr.rel (%p1473) target = $region80
        $region79: #{tpu_custom_call.1} parent=59 // pred_region
          %s1477 = ssub.s32 256, 256
          %1478 = vsyncadd %s1456, %s1477
          %s1479 = smul.addr %s37, 8
          %s1480 = sadd.s32 %s36, %s1479
          %s1481 = smul.addr %s1480, 64
          %s1482 = scalar_lea.hbm %s11, %s1481
          %s1483 = sshll.u32 %s1459, 4
          %s1484 = int_to_ptr.vmem [resolvable:$true] %s1483
          %1489 = dma.vmem_to_hbm [thread:$0]  %s1484, 256, %s1482, %s1456, 64, 128, 4
        $region80: #{tpu_custom_call.1} parent=59 // pred_fallthru
          _
      $region60: #{tpu_custom_call.1} parent=5 // pred_fallthru
        _
      %p1490 = scmp.le.s32.totalorder 2, %s27
      // Predicated region
      $region81: #{tpu_custom_call.1} parent=5 // pred_check
        %p1491 = pneg %p1490
      $region82: #{tpu_custom_call.1} parent=5 // pred_check_branch
        %1493 = sbr.rel (%p1491) target = $region84
      $region83: #{tpu_custom_call.1} parent=5 // pred_region
        %s1494 = ssub.s32 %s27, 2
        // Predicated region
        $region85: #{tpu_custom_call.1} parent=83 // pred_check
          %p1495 = pneg %p328
        $region86: #{tpu_custom_call.1} parent=83 // pred_check_branch
          %1497 = sbr.rel (%p1495) target = $region88
        $region87: #{tpu_custom_call.1} parent=83 // pred_region
          %s1498 = sand.u32 %s313, 1
          %s1499 = scalar_lea.sflag [#allocation7], %s1498
          %s1500 = sand.u32 %s313, 1
          %s1501 = smul.addr %s1500, 8
          %s1502 = scalar_lea.vmem [#allocation8], %s1501
          %1503 = dma.done %s1499, 128
        $region88: #{tpu_custom_call.1} parent=83 // pred_fallthru
          _
        // Predicated region
        $region89: #{tpu_custom_call.1} parent=83 // pred_check
          %p1504 = pneg %p356
        $region90: #{tpu_custom_call.1} parent=83 // pred_check_branch
          %1506 = sbr.rel (%p1504) target = $region92
        $region91: #{tpu_custom_call.1} parent=83 // pred_region
          %s1507 = sand.u32 %s341, 1
          %s1508 = scalar_lea.sflag [#allocation10], %s1507
          %s1509 = sand.u32 %s341, 1
          %s1510 = smul.addr %s1509, 16
          %s1511 = scalar_lea.vmem [#allocation9], %s1510
          %1512 = dma.done %s1508, 256
        $region92: #{tpu_custom_call.1} parent=83 // pred_fallthru
          _
      $region84: #{tpu_custom_call.1} parent=5 // pred_fallthru
        _
    $region6: #{tpu_custom_call.1} parent=1 // loop_footer
      %s31 = sadd.s32 1, %s27
    $region7: #{tpu_custom_call.1} parent=1 // loop_footer_branch
      %26 = sbr.rel target = $region3
    $region8: #{tpu_custom_call.1} parent=1 // loop_exit
      _
    %1513 = vsyncpa [#allocation6], 1
    %s1514 = scalar_lea.sflag [#allocation6], 1
    %1515 = vsyncpa %s1514, 1
    %1516 = vsyncpa [#allocation7], 1
    %s1517 = scalar_lea.sflag [#allocation7], 1
    %1518 = vsyncpa %s1517, 1
    %1519 = vsyncpa [#allocation10], 1
    %s1520 = scalar_lea.sflag [#allocation10], 1
    %1521 = vsyncpa %s1520, 1

</llo_original>
